<compile_context>
chip_gen: v7x
topology: tpu7x:2x2x1
jax: 0.10.0
libtpu: 0.0.40
codegen_flags: <defaults>
</compile_context>

<pallas_src>
import string

import jax
import jax.numpy as jnp
from jax.experimental import pallas as pl
from jax.experimental.pallas import tpu as pltpu


def _round_up(x, m):
    return (x + m - 1) // m * m


def gru_seq_kernel(gi_ref,      # VMEM (T, B, 3H) pre-gathered, bias-folded input proj
                   mask_ref,    # VMEM (T, B, H)  1.0 for valid steps, 0.0 past the name
                   whh_ref,     # VMEM (H, 3H)
                   bhn_ref,     # VMEM (1, H)   b_hn only (must sit inside r*(...))
                   who_ref,     # VMEM (H, O_pad)
                   bho_ref,     # VMEM (1, O_pad), padded lanes = -1e30
                   logp_ref,    # out  (B, O_pad)
                   hfin_ref):   # out  (B, H)
    T = gi_ref.shape[0]
    B, H = hfin_ref.shape

    # Hoist the tiny bias broadcast out of the loop (JAX does not CSE broadcasts).
    bhn = jnp.broadcast_to(bhn_ref[...], (B, H))

    def step(t, h):
        gi = gi_ref[t]                                                     # (B, 3H)
        gh = jnp.dot(h, whh_ref[...], preferred_element_type=jnp.float32)  # (B, 3H) MXU
        # nn.GRU gate order [r, z, n]; all slices are 128-lane aligned (H == 128).
        r = jax.nn.sigmoid(gi[:, 0:H] + gh[:, 0:H])
        z = jax.nn.sigmoid(gi[:, H:2 * H] + gh[:, H:2 * H])
        n = jnp.tanh(gi[:, 2 * H:3 * H] + r * (gh[:, 2 * H:3 * H] + bhn))
        h_new = (1.0 - z) * n + z * h
        m = mask_ref[t]                                                    # (B, H)
        return m * h_new + (1.0 - m) * h          # finished rows keep their h

    h0 = jnp.zeros((B, H), jnp.float32)
    h_fin = jax.lax.fori_loop(0, T, step, h0, unroll=True if T <= 32 else 8)

    # h2o Linear + LogSoftmax, once, on the final hidden state (what infer() uses).
    logits = (jnp.dot(h_fin, who_ref[...], preferred_element_type=jnp.float32)
              + bho_ref[...])                                              # (B, O_pad)
    mx = jnp.max(logits, axis=-1, keepdims=True)
    lse = mx + jnp.log(jnp.sum(jnp.exp(logits - mx), axis=-1, keepdims=True))
    logp_ref[...] = logits - lse
    hfin_ref[...] = h_fin


def make_gru_net_forward(seq_len, batch, input_size, hidden_size, output_size):
    """Builds a fused whole-sequence forward: (letter_idx[B,T], lengths[B], params)
    -> (logp[B, n_languages], h_final[B, H])."""
    H = hidden_size
    T = seq_len
    B = _round_up(max(batch, 8), 8)                       # fill VPU sublanes
    O_pad = _round_up(max(output_size, 128), 128)

    in_specs = [
        pl.BlockSpec((T, B, 3 * H), lambda i: (0, 0, 0)),   # gi (pre-gathered)
        pl.BlockSpec((T, B, H),     lambda i: (0, 0, 0)),   # step-validity mask
        pl.BlockSpec((H, 3 * H),    lambda i: (0, 0)),      # whh
        pl.BlockSpec((1, H),        lambda i: (0, 0)),      # b_hn
        pl.BlockSpec((H, O_pad),    lambda i: (0, 0)),      # who
        pl.BlockSpec((1, O_pad),    lambda i: (0, 0)),      # bho
    ]
    out_specs = (
        pl.BlockSpec((B, O_pad), lambda i: (0, 0)),
        pl.BlockSpec((B, H),     lambda i: (0, 0)),
    )

    cost = pl.CostEstimate(
        flops=T * (2 * B * H * 3 * H + 12 * B * H) + 2 * B * H * O_pad,
        transcendentals=T * 3 * B * H + 2 * B * O_pad,
        bytes_accessed=4 * (T * B * 3 * H + T * B * H + H * 3 * H + H
                            + H * O_pad + O_pad + B * O_pad + B * H),
    )

    call = pl.pallas_call(
        gru_seq_kernel,
        out_shape=(
            jax.ShapeDtypeStruct((B, O_pad), jnp.float32),   # padded log-softmax
            jax.ShapeDtypeStruct((B, H), jnp.float32),       # final hidden states
        ),
        grid=(1,),                                           # single step; loop is in-kernel
        in_specs=in_specs,
        out_specs=out_specs,
        compiler_params=pltpu.CompilerParams(
            dimension_semantics=("arbitrary",)),
        cost_estimate=cost,
    )

    @jax.jit
    def forward(letter_idx_bt, lengths, kernel_params):
        wih_rows, whh_t, bhn, who_pad, bho_pad = kernel_params
        nb = letter_idx_bt.shape[0]
        pad_b = B - nb
        idx = jnp.pad(letter_idx_bt, ((0, pad_b), (0, 0)))            # (B, T)
        lens = jnp.pad(lengths, (0, pad_b))                           # (B,)
        # Pre-gather the bias-folded input projections in XLA (negligible cost,
        # removes the gather table + dynamic slice from the kernel's serial path).
        gi_all = wih_rows[idx.T]                                      # (T, B, 3H)
        mask = (jnp.arange(T, dtype=jnp.int32)[:, None]
                < lens[None, :]).astype(jnp.float32)                  # (T, B)
        mask = jnp.broadcast_to(mask[:, :, None], (T, B, H))
        logp_pad, h_fin = call(gi_all, mask, whh_t, bhn, who_pad, bho_pad)
        return logp_pad[:nb, :output_size], h_fin[:nb]

    return forward


def init_params(key, input_size, hidden_size, output_size):
    """Deterministic init mimicking PyTorch's default U(-1/sqrt(H), 1/sqrt(H)).

    Layout (pre-transposed so math is x @ W): wih_t (I, 3H), whh_t (H, 3H),
    bih (1, 3H), bhh (1, 3H), who_t (H, O), bho (1, O). Gate order [r, z, n].
    """
    ks = jax.random.split(key, 6)
    bound = 1.0 / jnp.sqrt(jnp.float32(hidden_size))
    u = lambda k, shape: jax.random.uniform(k, shape, jnp.float32, -bound, bound)
    wih_t = u(ks[0], (input_size, 3 * hidden_size))
    whh_t = u(ks[1], (hidden_size, 3 * hidden_size))
    bih = u(ks[2], (1, 3 * hidden_size))
    bhh = u(ks[3], (1, 3 * hidden_size))
    who_t = u(ks[4], (hidden_size, output_size))
    bho = u(ks[5], (1, output_size))
    return (wih_t, whh_t, bih, bhh, who_t, bho)


def prepare_kernel_params(params, input_size, hidden_size, output_size):
    """Host-side one-time bias folding / lane padding into the kernel layout."""
    wih_t, whh_t, bih, bhh, who_t, bho = params
    H = hidden_size
    O_pad = _round_up(max(output_size, 128), 128)
    # Fold (b_ir+b_hr, b_iz+b_hz, b_in) into the gathered input-projection rows.
    b_fold = jnp.concatenate([bih[:, :2 * H] + bhh[:, :2 * H], bih[:, 2 * H:]], axis=1)
    wih_rows = wih_t + b_fold                                  # (I, 3H)
    bhn = bhh[:, 2 * H:]                                       # (1, H) stays separate
    who_pad = jnp.pad(who_t, ((0, 0), (0, O_pad - output_size)))
    # Padded logits get a huge negative bias -> exp() == 0 in the logsoftmax.
    bho_pad = jnp.pad(bho, ((0, 0), (0, O_pad - output_size)), constant_values=-1e30)
    return (wih_rows, whh_t, bhn, who_pad, bho_pad)


def name_to_indices(name, all_letters):
    """Letter -> index (replaces the one-hot name_rep); errors on unknown chars."""
    idx = []
    for letter in name:
        pos = all_letters.find(letter)
        if pos < 0:
            raise ValueError(f"unknown character {letter!r}")
        idx.append(pos)
    return idx


def reference_infer(letter_idx, params, hidden_size):
    """Pure-JAX replica of the PyTorch infer() loop (correctness check)."""
    wih_t, whh_t, bih, bhh, who_t, bho = params
    H = hidden_size
    h = jnp.zeros((1, H), jnp.float32)
    for pos in [int(p) for p in letter_idx]:
        gi = wih_t[pos][None, :] + bih
        gh = h @ whh_t + bhh
        r = jax.nn.sigmoid(gi[:, :H] + gh[:, :H])
        z = jax.nn.sigmoid(gi[:, H:2 * H] + gh[:, H:2 * H])
        n = jnp.tanh(gi[:, 2 * H:] + r * gh[:, 2 * H:])
        h = (1.0 - z) * n + z * h
    logits = h @ who_t + bho
    m = jnp.max(logits, axis=-1, keepdims=True)
    logp = logits - (m + jnp.log(jnp.sum(jnp.exp(logits - m), axis=-1, keepdims=True)))
    return logp, h


if __name__ == "__main__":
    all_letters = string.ascii_letters + ".,;"
    input_size = len(all_letters)     # 55
    hidden_size = 128                 # matches n_hidden in the original script
    output_size = 10                  # small synthetic n_languages

    key = jax.random.PRNGKey(0)
    params = init_params(key, input_size, hidden_size, output_size)
    kparams = prepare_kernel_params(params, input_size, hidden_size, output_size)

    # Mimic `infer(net, name)` for a small batch of names (each processed
    # independently, exactly like the PyTorch per-name loop).
    names = ["Adam", "Maria", "Chen", "Olga"]
    T = max(len(n) for n in names)
    rows, lens = [], []
    for n in names:
        ids = name_to_indices(n, all_letters)
        lens.append(len(ids))
        rows.append(ids + [0] * (T - len(ids)))
    letter_idx_bt = jnp.asarray(rows, jnp.int32)            # (4, T)
    lengths = jnp.asarray(lens, jnp.int32)                  # (4,)

    forward = make_gru_net_forward(T, letter_idx_bt.shape[0],
                                   input_size, hidden_size, output_size)
    logp, h_fin = forward(letter_idx_bt, lengths, kparams)
    logp = jax.block_until_ready(logp)
    h_fin = jax.block_until_ready(h_fin)

    assert logp.shape == (len(names), output_size)
    assert h_fin.shape == (len(names), hidden_size)

    # Check each name against a pure-JAX replica of the PyTorch step-by-step loop.
    for b, name in enumerate(names):
        ids = name_to_indices(name, all_letters)
        ref_logp, ref_h = reference_infer(ids, params, hidden_size)
        assert abs(float(jnp.sum(jnp.exp(logp[b]))) - 1.0) < 1e-4
        assert jnp.allclose(logp[b][None, :], ref_logp, atol=1e-3, rtol=1e-3)
        assert jnp.allclose(h_fin[b][None, :], ref_h, atol=1e-3, rtol=1e-3)

    print("KERNEL_OK")
</pallas_src>

<mosaic_0001>
module attributes {stable_mosaic.version = 11 : i64} {
  func.func @gru_seq_kernel(%arg0: i32, %arg1: memref<5x8x384xf32, #tpu.memory_space<vmem>>, %arg2: memref<5x8x128xf32, #tpu.memory_space<vmem>>, %arg3: memref<128x384xf32, #tpu.memory_space<vmem>>, %arg4: memref<1x128xf32, #tpu.memory_space<vmem>>, %arg5: memref<128x128xf32, #tpu.memory_space<vmem>>, %arg6: memref<1x128xf32, #tpu.memory_space<vmem>>, %arg7: memref<8x128xf32, #tpu.memory_space<vmem>>, %arg8: memref<8x128xf32, #tpu.memory_space<vmem>>) attributes {dimension_semantics = [#tpu.dimension_semantics<arbitrary>], iteration_bounds = array<i64: 1>, scalar_prefetch = 0 : i64, scratch_operands = 0 : i64, tpu.core_type = #tpu.core_type<tc>, window_params = [{pipeline_mode = #tpu.pipeline_mode<synchronous>, transform_indices = @transform_0, window_bounds = array<i64: 5, 8, 384>}, {pipeline_mode = #tpu.pipeline_mode<synchronous>, transform_indices = @transform_1, window_bounds = array<i64: 5, 8, 128>}, {pipeline_mode = #tpu.pipeline_mode<synchronous>, transform_indices = @transform_2, window_bounds = array<i64: 128, 384>}, {pipeline_mode = #tpu.pipeline_mode<synchronous>, transform_indices = @transform_3, window_bounds = array<i64: 1, 128>}, {pipeline_mode = #tpu.pipeline_mode<synchronous>, transform_indices = @transform_4, window_bounds = array<i64: 128, 128>}, {pipeline_mode = #tpu.pipeline_mode<synchronous>, transform_indices = @transform_5, window_bounds = array<i64: 1, 128>}, {pipeline_mode = #tpu.pipeline_mode<synchronous>, transform_indices = @transform_6, window_bounds = array<i64: 8, 128>}, {pipeline_mode = #tpu.pipeline_mode<synchronous>, transform_indices = @transform_7, window_bounds = array<i64: 8, 128>}]} {
    %c0 = arith.constant 0 : index
    %c0_0 = arith.constant 0 : index
    %0 = vector.load %arg4[%c0, %c0_0] : memref<1x128xf32, #tpu.memory_space<vmem>>, vector<1x128xf32>
    %1 = vector.shape_cast %0 : vector<1x128xf32> to vector<1x128xf32>
    %2 = vector.broadcast %1 : vector<1x128xf32> to vector<8x128xf32>
    %cst = arith.constant 0.000000e+00 : f32
    %3 = vector.broadcast %cst : f32 to vector<8x128xf32>
    %c0_i32 = arith.constant 0 : i32
    %4 = arith.index_cast %c0_i32 : i32 to index
    %c0_1 = arith.constant 0 : index
    %c0_2 = arith.constant 0 : index
    %5 = vector.load %arg1[%4, %c0_1, %c0_2] : memref<5x8x384xf32, #tpu.memory_space<vmem>>, vector<1x8x384xf32>
    %6 = vector.shape_cast %5 : vector<1x8x384xf32> to vector<8x384xf32>
    %c0_3 = arith.constant 0 : index
    %c0_4 = arith.constant 0 : index
    %7 = vector.load %arg3[%c0_3, %c0_4] : memref<128x384xf32, #tpu.memory_space<vmem>>, vector<128x384xf32>
    %cst_5 = arith.constant dense<0.000000e+00> : vector<8x384xf32>
    %8 = tpu.matmul %3, %7, %cst_5 {dimension_numbers = #tpu.dot_dimension_numbers<[1], [0], [0], [1], [0, 0, 1, 1], [], []>} : vector<8x128xf32>, vector<128x384xf32>, vector<8x384xf32> -> vector<8x384xf32>
    %9 = vector.extract_strided_slice %6 {offsets = [0, 0], sizes = [8, 128], strides = [1, 1]} : vector<8x384xf32> to vector<8x128xf32>
    %10 = vector.extract_strided_slice %8 {offsets = [0, 0], sizes = [8, 128], strides = [1, 1]} : vector<8x384xf32> to vector<8x128xf32>
    %11 = arith.addf %9, %10 : vector<8x128xf32>
    %12 = arith.negf %11 : vector<8x128xf32>
    %13 = math.exp %12 : vector<8x128xf32>
    %cst_6 = arith.constant 1.000000e+00 : f32
    %14 = vector.broadcast %cst_6 : f32 to vector<8x128xf32>
    %15 = arith.addf %14, %13 : vector<8x128xf32>
    %16 = arith.divf %14, %15 : vector<8x128xf32>
    %17 = vector.extract_strided_slice %6 {offsets = [0, 128], sizes = [8, 128], strides = [1, 1]} : vector<8x384xf32> to vector<8x128xf32>
    %18 = vector.extract_strided_slice %8 {offsets = [0, 128], sizes = [8, 128], strides = [1, 1]} : vector<8x384xf32> to vector<8x128xf32>
    %19 = arith.addf %17, %18 : vector<8x128xf32>
    %20 = arith.negf %19 : vector<8x128xf32>
    %21 = math.exp %20 : vector<8x128xf32>
    %cst_7 = arith.constant 1.000000e+00 : f32
    %22 = vector.broadcast %cst_7 : f32 to vector<8x128xf32>
    %23 = arith.addf %22, %21 : vector<8x128xf32>
    %24 = arith.divf %22, %23 : vector<8x128xf32>
    %25 = vector.extract_strided_slice %6 {offsets = [0, 256], sizes = [8, 128], strides = [1, 1]} : vector<8x384xf32> to vector<8x128xf32>
    %26 = vector.extract_strided_slice %8 {offsets = [0, 256], sizes = [8, 128], strides = [1, 1]} : vector<8x384xf32> to vector<8x128xf32>
    %27 = arith.addf %26, %2 : vector<8x128xf32>
    %28 = arith.mulf %16, %27 : vector<8x128xf32>
    %29 = arith.addf %25, %28 : vector<8x128xf32>
    %30 = math.tanh %29 : vector<8x128xf32>
    %cst_8 = arith.constant 1.000000e+00 : f32
    %31 = vector.broadcast %cst_8 : f32 to vector<8x128xf32>
    %32 = arith.subf %31, %24 : vector<8x128xf32>
    %33 = arith.mulf %32, %30 : vector<8x128xf32>
    %34 = arith.mulf %24, %3 : vector<8x128xf32>
    %35 = arith.addf %33, %34 : vector<8x128xf32>
    %36 = arith.index_cast %c0_i32 : i32 to index
    %c0_9 = arith.constant 0 : index
    %c0_10 = arith.constant 0 : index
    %37 = vector.load %arg2[%36, %c0_9, %c0_10] : memref<5x8x128xf32, #tpu.memory_space<vmem>>, vector<1x8x128xf32>
    %38 = vector.shape_cast %37 : vector<1x8x128xf32> to vector<8x128xf32>
    %39 = arith.mulf %38, %35 : vector<8x128xf32>
    %cst_11 = arith.constant 1.000000e+00 : f32
    %40 = vector.broadcast %cst_11 : f32 to vector<8x128xf32>
    %41 = arith.subf %40, %38 : vector<8x128xf32>
    %42 = arith.mulf %41, %3 : vector<8x128xf32>
    %43 = arith.addf %39, %42 : vector<8x128xf32>
    %c1_i32 = arith.constant 1 : i32
    %44 = arith.index_cast %c1_i32 : i32 to index
    %c0_12 = arith.constant 0 : index
    %c0_13 = arith.constant 0 : index
    %45 = vector.load %arg1[%44, %c0_12, %c0_13] : memref<5x8x384xf32, #tpu.memory_space<vmem>>, vector<1x8x384xf32>
    %46 = vector.shape_cast %45 : vector<1x8x384xf32> to vector<8x384xf32>
    %c0_14 = arith.constant 0 : index
    %c0_15 = arith.constant 0 : index
    %47 = vector.load %arg3[%c0_14, %c0_15] : memref<128x384xf32, #tpu.memory_space<vmem>>, vector<128x384xf32>
    %cst_16 = arith.constant dense<0.000000e+00> : vector<8x384xf32>
    %48 = tpu.matmul %43, %47, %cst_16 {dimension_numbers = #tpu.dot_dimension_numbers<[1], [0], [0], [1], [0, 0, 1, 1], [], []>} : vector<8x128xf32>, vector<128x384xf32>, vector<8x384xf32> -> vector<8x384xf32>
    %49 = vector.extract_strided_slice %46 {offsets = [0, 0], sizes = [8, 128], strides = [1, 1]} : vector<8x384xf32> to vector<8x128xf32>
    %50 = vector.extract_strided_slice %48 {offsets = [0, 0], sizes = [8, 128], strides = [1, 1]} : vector<8x384xf32> to vector<8x128xf32>
    %51 = arith.addf %49, %50 : vector<8x128xf32>
    %52 = arith.negf %51 : vector<8x128xf32>
    %53 = math.exp %52 : vector<8x128xf32>
    %cst_17 = arith.constant 1.000000e+00 : f32
    %54 = vector.broadcast %cst_17 : f32 to vector<8x128xf32>
    %55 = arith.addf %54, %53 : vector<8x128xf32>
    %56 = arith.divf %54, %55 : vector<8x128xf32>
    %57 = vector.extract_strided_slice %46 {offsets = [0, 128], sizes = [8, 128], strides = [1, 1]} : vector<8x384xf32> to vector<8x128xf32>
    %58 = vector.extract_strided_slice %48 {offsets = [0, 128], sizes = [8, 128], strides = [1, 1]} : vector<8x384xf32> to vector<8x128xf32>
    %59 = arith.addf %57, %58 : vector<8x128xf32>
    %60 = arith.negf %59 : vector<8x128xf32>
    %61 = math.exp %60 : vector<8x128xf32>
    %cst_18 = arith.constant 1.000000e+00 : f32
    %62 = vector.broadcast %cst_18 : f32 to vector<8x128xf32>
    %63 = arith.addf %62, %61 : vector<8x128xf32>
    %64 = arith.divf %62, %63 : vector<8x128xf32>
    %65 = vector.extract_strided_slice %46 {offsets = [0, 256], sizes = [8, 128], strides = [1, 1]} : vector<8x384xf32> to vector<8x128xf32>
    %66 = vector.extract_strided_slice %48 {offsets = [0, 256], sizes = [8, 128], strides = [1, 1]} : vector<8x384xf32> to vector<8x128xf32>
    %67 = arith.addf %66, %2 : vector<8x128xf32>
    %68 = arith.mulf %56, %67 : vector<8x128xf32>
    %69 = arith.addf %65, %68 : vector<8x128xf32>
    %70 = math.tanh %69 : vector<8x128xf32>
    %cst_19 = arith.constant 1.000000e+00 : f32
    %71 = vector.broadcast %cst_19 : f32 to vector<8x128xf32>
    %72 = arith.subf %71, %64 : vector<8x128xf32>
    %73 = arith.mulf %72, %70 : vector<8x128xf32>
    %74 = arith.mulf %64, %43 : vector<8x128xf32>
    %75 = arith.addf %73, %74 : vector<8x128xf32>
    %76 = arith.index_cast %c1_i32 : i32 to index
    %c0_20 = arith.constant 0 : index
    %c0_21 = arith.constant 0 : index
    %77 = vector.load %arg2[%76, %c0_20, %c0_21] : memref<5x8x128xf32, #tpu.memory_space<vmem>>, vector<1x8x128xf32>
    %78 = vector.shape_cast %77 : vector<1x8x128xf32> to vector<8x128xf32>
    %79 = arith.mulf %78, %75 : vector<8x128xf32>
    %cst_22 = arith.constant 1.000000e+00 : f32
    %80 = vector.broadcast %cst_22 : f32 to vector<8x128xf32>
    %81 = arith.subf %80, %78 : vector<8x128xf32>
    %82 = arith.mulf %81, %43 : vector<8x128xf32>
    %83 = arith.addf %79, %82 : vector<8x128xf32>
    %c2_i32 = arith.constant 2 : i32
    %84 = arith.index_cast %c2_i32 : i32 to index
    %c0_23 = arith.constant 0 : index
    %c0_24 = arith.constant 0 : index
    %85 = vector.load %arg1[%84, %c0_23, %c0_24] : memref<5x8x384xf32, #tpu.memory_space<vmem>>, vector<1x8x384xf32>
    %86 = vector.shape_cast %85 : vector<1x8x384xf32> to vector<8x384xf32>
    %c0_25 = arith.constant 0 : index
    %c0_26 = arith.constant 0 : index
    %87 = vector.load %arg3[%c0_25, %c0_26] : memref<128x384xf32, #tpu.memory_space<vmem>>, vector<128x384xf32>
    %cst_27 = arith.constant dense<0.000000e+00> : vector<8x384xf32>
    %88 = tpu.matmul %83, %87, %cst_27 {dimension_numbers = #tpu.dot_dimension_numbers<[1], [0], [0], [1], [0, 0, 1, 1], [], []>} : vector<8x128xf32>, vector<128x384xf32>, vector<8x384xf32> -> vector<8x384xf32>
    %89 = vector.extract_strided_slice %86 {offsets = [0, 0], sizes = [8, 128], strides = [1, 1]} : vector<8x384xf32> to vector<8x128xf32>
    %90 = vector.extract_strided_slice %88 {offsets = [0, 0], sizes = [8, 128], strides = [1, 1]} : vector<8x384xf32> to vector<8x128xf32>
    %91 = arith.addf %89, %90 : vector<8x128xf32>
    %92 = arith.negf %91 : vector<8x128xf32>
    %93 = math.exp %92 : vector<8x128xf32>
    %cst_28 = arith.constant 1.000000e+00 : f32
    %94 = vector.broadcast %cst_28 : f32 to vector<8x128xf32>
    %95 = arith.addf %94, %93 : vector<8x128xf32>
    %96 = arith.divf %94, %95 : vector<8x128xf32>
    %97 = vector.extract_strided_slice %86 {offsets = [0, 128], sizes = [8, 128], strides = [1, 1]} : vector<8x384xf32> to vector<8x128xf32>
    %98 = vector.extract_strided_slice %88 {offsets = [0, 128], sizes = [8, 128], strides = [1, 1]} : vector<8x384xf32> to vector<8x128xf32>
    %99 = arith.addf %97, %98 : vector<8x128xf32>
    %100 = arith.negf %99 : vector<8x128xf32>
    %101 = math.exp %100 : vector<8x128xf32>
    %cst_29 = arith.constant 1.000000e+00 : f32
    %102 = vector.broadcast %cst_29 : f32 to vector<8x128xf32>
    %103 = arith.addf %102, %101 : vector<8x128xf32>
    %104 = arith.divf %102, %103 : vector<8x128xf32>
    %105 = vector.extract_strided_slice %86 {offsets = [0, 256], sizes = [8, 128], strides = [1, 1]} : vector<8x384xf32> to vector<8x128xf32>
    %106 = vector.extract_strided_slice %88 {offsets = [0, 256], sizes = [8, 128], strides = [1, 1]} : vector<8x384xf32> to vector<8x128xf32>
    %107 = arith.addf %106, %2 : vector<8x128xf32>
    %108 = arith.mulf %96, %107 : vector<8x128xf32>
    %109 = arith.addf %105, %108 : vector<8x128xf32>
    %110 = math.tanh %109 : vector<8x128xf32>
    %cst_30 = arith.constant 1.000000e+00 : f32
    %111 = vector.broadcast %cst_30 : f32 to vector<8x128xf32>
    %112 = arith.subf %111, %104 : vector<8x128xf32>
    %113 = arith.mulf %112, %110 : vector<8x128xf32>
    %114 = arith.mulf %104, %83 : vector<8x128xf32>
    %115 = arith.addf %113, %114 : vector<8x128xf32>
    %116 = arith.index_cast %c2_i32 : i32 to index
    %c0_31 = arith.constant 0 : index
    %c0_32 = arith.constant 0 : index
    %117 = vector.load %arg2[%116, %c0_31, %c0_32] : memref<5x8x128xf32, #tpu.memory_space<vmem>>, vector<1x8x128xf32>
    %118 = vector.shape_cast %117 : vector<1x8x128xf32> to vector<8x128xf32>
    %119 = arith.mulf %118, %115 : vector<8x128xf32>
    %cst_33 = arith.constant 1.000000e+00 : f32
    %120 = vector.broadcast %cst_33 : f32 to vector<8x128xf32>
    %121 = arith.subf %120, %118 : vector<8x128xf32>
    %122 = arith.mulf %121, %83 : vector<8x128xf32>
    %123 = arith.addf %119, %122 : vector<8x128xf32>
    %c3_i32 = arith.constant 3 : i32
    %124 = arith.index_cast %c3_i32 : i32 to index
    %c0_34 = arith.constant 0 : index
    %c0_35 = arith.constant 0 : index
    %125 = vector.load %arg1[%124, %c0_34, %c0_35] : memref<5x8x384xf32, #tpu.memory_space<vmem>>, vector<1x8x384xf32>
    %126 = vector.shape_cast %125 : vector<1x8x384xf32> to vector<8x384xf32>
    %c0_36 = arith.constant 0 : index
    %c0_37 = arith.constant 0 : index
    %127 = vector.load %arg3[%c0_36, %c0_37] : memref<128x384xf32, #tpu.memory_space<vmem>>, vector<128x384xf32>
    %cst_38 = arith.constant dense<0.000000e+00> : vector<8x384xf32>
    %128 = tpu.matmul %123, %127, %cst_38 {dimension_numbers = #tpu.dot_dimension_numbers<[1], [0], [0], [1], [0, 0, 1, 1], [], []>} : vector<8x128xf32>, vector<128x384xf32>, vector<8x384xf32> -> vector<8x384xf32>
    %129 = vector.extract_strided_slice %126 {offsets = [0, 0], sizes = [8, 128], strides = [1, 1]} : vector<8x384xf32> to vector<8x128xf32>
    %130 = vector.extract_strided_slice %128 {offsets = [0, 0], sizes = [8, 128], strides = [1, 1]} : vector<8x384xf32> to vector<8x128xf32>
    %131 = arith.addf %129, %130 : vector<8x128xf32>
    %132 = arith.negf %131 : vector<8x128xf32>
    %133 = math.exp %132 : vector<8x128xf32>
    %cst_39 = arith.constant 1.000000e+00 : f32
    %134 = vector.broadcast %cst_39 : f32 to vector<8x128xf32>
    %135 = arith.addf %134, %133 : vector<8x128xf32>
    %136 = arith.divf %134, %135 : vector<8x128xf32>
    %137 = vector.extract_strided_slice %126 {offsets = [0, 128], sizes = [8, 128], strides = [1, 1]} : vector<8x384xf32> to vector<8x128xf32>
    %138 = vector.extract_strided_slice %128 {offsets = [0, 128], sizes = [8, 128], strides = [1, 1]} : vector<8x384xf32> to vector<8x128xf32>
    %139 = arith.addf %137, %138 : vector<8x128xf32>
    %140 = arith.negf %139 : vector<8x128xf32>
    %141 = math.exp %140 : vector<8x128xf32>
    %cst_40 = arith.constant 1.000000e+00 : f32
    %142 = vector.broadcast %cst_40 : f32 to vector<8x128xf32>
    %143 = arith.addf %142, %141 : vector<8x128xf32>
    %144 = arith.divf %142, %143 : vector<8x128xf32>
    %145 = vector.extract_strided_slice %126 {offsets = [0, 256], sizes = [8, 128], strides = [1, 1]} : vector<8x384xf32> to vector<8x128xf32>
    %146 = vector.extract_strided_slice %128 {offsets = [0, 256], sizes = [8, 128], strides = [1, 1]} : vector<8x384xf32> to vector<8x128xf32>
    %147 = arith.addf %146, %2 : vector<8x128xf32>
    %148 = arith.mulf %136, %147 : vector<8x128xf32>
    %149 = arith.addf %145, %148 : vector<8x128xf32>
    %150 = math.tanh %149 : vector<8x128xf32>
    %cst_41 = arith.constant 1.000000e+00 : f32
    %151 = vector.broadcast %cst_41 : f32 to vector<8x128xf32>
    %152 = arith.subf %151, %144 : vector<8x128xf32>
    %153 = arith.mulf %152, %150 : vector<8x128xf32>
    %154 = arith.mulf %144, %123 : vector<8x128xf32>
    %155 = arith.addf %153, %154 : vector<8x128xf32>
    %156 = arith.index_cast %c3_i32 : i32 to index
    %c0_42 = arith.constant 0 : index
    %c0_43 = arith.constant 0 : index
    %157 = vector.load %arg2[%156, %c0_42, %c0_43] : memref<5x8x128xf32, #tpu.memory_space<vmem>>, vector<1x8x128xf32>
    %158 = vector.shape_cast %157 : vector<1x8x128xf32> to vector<8x128xf32>
    %159 = arith.mulf %158, %155 : vector<8x128xf32>
    %cst_44 = arith.constant 1.000000e+00 : f32
    %160 = vector.broadcast %cst_44 : f32 to vector<8x128xf32>
    %161 = arith.subf %160, %158 : vector<8x128xf32>
    %162 = arith.mulf %161, %123 : vector<8x128xf32>
    %163 = arith.addf %159, %162 : vector<8x128xf32>
    %c4_i32 = arith.constant 4 : i32
    %164 = arith.index_cast %c4_i32 : i32 to index
    %c0_45 = arith.constant 0 : index
    %c0_46 = arith.constant 0 : index
    %165 = vector.load %arg1[%164, %c0_45, %c0_46] : memref<5x8x384xf32, #tpu.memory_space<vmem>>, vector<1x8x384xf32>
    %166 = vector.shape_cast %165 : vector<1x8x384xf32> to vector<8x384xf32>
    %c0_47 = arith.constant 0 : index
    %c0_48 = arith.constant 0 : index
    %167 = vector.load %arg3[%c0_47, %c0_48] : memref<128x384xf32, #tpu.memory_space<vmem>>, vector<128x384xf32>
    %cst_49 = arith.constant dense<0.000000e+00> : vector<8x384xf32>
    %168 = tpu.matmul %163, %167, %cst_49 {dimension_numbers = #tpu.dot_dimension_numbers<[1], [0], [0], [1], [0, 0, 1, 1], [], []>} : vector<8x128xf32>, vector<128x384xf32>, vector<8x384xf32> -> vector<8x384xf32>
    %169 = vector.extract_strided_slice %166 {offsets = [0, 0], sizes = [8, 128], strides = [1, 1]} : vector<8x384xf32> to vector<8x128xf32>
    %170 = vector.extract_strided_slice %168 {offsets = [0, 0], sizes = [8, 128], strides = [1, 1]} : vector<8x384xf32> to vector<8x128xf32>
    %171 = arith.addf %169, %170 : vector<8x128xf32>
    %172 = arith.negf %171 : vector<8x128xf32>
    %173 = math.exp %172 : vector<8x128xf32>
    %cst_50 = arith.constant 1.000000e+00 : f32
    %174 = vector.broadcast %cst_50 : f32 to vector<8x128xf32>
    %175 = arith.addf %174, %173 : vector<8x128xf32>
    %176 = arith.divf %174, %175 : vector<8x128xf32>
    %177 = vector.extract_strided_slice %166 {offsets = [0, 128], sizes = [8, 128], strides = [1, 1]} : vector<8x384xf32> to vector<8x128xf32>
    %178 = vector.extract_strided_slice %168 {offsets = [0, 128], sizes = [8, 128], strides = [1, 1]} : vector<8x384xf32> to vector<8x128xf32>
    %179 = arith.addf %177, %178 : vector<8x128xf32>
    %180 = arith.negf %179 : vector<8x128xf32>
    %181 = math.exp %180 : vector<8x128xf32>
    %cst_51 = arith.constant 1.000000e+00 : f32
    %182 = vector.broadcast %cst_51 : f32 to vector<8x128xf32>
    %183 = arith.addf %182, %181 : vector<8x128xf32>
    %184 = arith.divf %182, %183 : vector<8x128xf32>
    %185 = vector.extract_strided_slice %166 {offsets = [0, 256], sizes = [8, 128], strides = [1, 1]} : vector<8x384xf32> to vector<8x128xf32>
    %186 = vector.extract_strided_slice %168 {offsets = [0, 256], sizes = [8, 128], strides = [1, 1]} : vector<8x384xf32> to vector<8x128xf32>
    %187 = arith.addf %186, %2 : vector<8x128xf32>
    %188 = arith.mulf %176, %187 : vector<8x128xf32>
    %189 = arith.addf %185, %188 : vector<8x128xf32>
    %190 = math.tanh %189 : vector<8x128xf32>
    %cst_52 = arith.constant 1.000000e+00 : f32
    %191 = vector.broadcast %cst_52 : f32 to vector<8x128xf32>
    %192 = arith.subf %191, %184 : vector<8x128xf32>
    %193 = arith.mulf %192, %190 : vector<8x128xf32>
    %194 = arith.mulf %184, %163 : vector<8x128xf32>
    %195 = arith.addf %193, %194 : vector<8x128xf32>
    %196 = arith.index_cast %c4_i32 : i32 to index
    %c0_53 = arith.constant 0 : index
    %c0_54 = arith.constant 0 : index
    %197 = vector.load %arg2[%196, %c0_53, %c0_54] : memref<5x8x128xf32, #tpu.memory_space<vmem>>, vector<1x8x128xf32>
    %198 = vector.shape_cast %197 : vector<1x8x128xf32> to vector<8x128xf32>
    %199 = arith.mulf %198, %195 : vector<8x128xf32>
    %cst_55 = arith.constant 1.000000e+00 : f32
    %200 = vector.broadcast %cst_55 : f32 to vector<8x128xf32>
    %201 = arith.subf %200, %198 : vector<8x128xf32>
    %202 = arith.mulf %201, %163 : vector<8x128xf32>
    %203 = arith.addf %199, %202 : vector<8x128xf32>
    %c5_i32 = arith.constant 5 : i32
    %c0_56 = arith.constant 0 : index
    %c0_57 = arith.constant 0 : index
    %204 = vector.load %arg5[%c0_56, %c0_57] : memref<128x128xf32, #tpu.memory_space<vmem>>, vector<128x128xf32>
    %cst_58 = arith.constant dense<0.000000e+00> : vector<8x128xf32>
    %205 = tpu.matmul %203, %204, %cst_58 {dimension_numbers = #tpu.dot_dimension_numbers<[1], [0], [0], [1], [0, 0, 1, 1], [], []>} : vector<8x128xf32>, vector<128x128xf32>, vector<8x128xf32> -> vector<8x128xf32>
    %c0_59 = arith.constant 0 : index
    %c0_60 = arith.constant 0 : index
    %206 = vector.load %arg6[%c0_59, %c0_60] : memref<1x128xf32, #tpu.memory_space<vmem>>, vector<1x128xf32>
    %207 = vector.broadcast %206 : vector<1x128xf32> to vector<8x128xf32>
    %208 = arith.addf %205, %207 : vector<8x128xf32>
    %cst_61 = arith.constant dense<0xFF800000> : vector<8xf32>
    %209 = vector.multi_reduction <maximumf>, %208, %cst_61 [1] : vector<8x128xf32> to vector<8xf32>
    %210 = vector.shape_cast %209 : vector<8xf32> to vector<8x1xf32>
    %211 = vector.broadcast %210 : vector<8x1xf32> to vector<8x128xf32>
    %212 = arith.subf %208, %211 : vector<8x128xf32>
    %213 = math.exp %212 : vector<8x128xf32>
    %cst_62 = arith.constant dense<0.000000e+00> : vector<8xf32>
    %214 = vector.multi_reduction <add>, %213, %cst_62 [1] : vector<8x128xf32> to vector<8xf32>
    %215 = vector.shape_cast %214 : vector<8xf32> to vector<8x1xf32>
    %216 = math.log %215 : vector<8x1xf32>
    %217 = arith.addf %210, %216 : vector<8x1xf32>
    %218 = vector.broadcast %217 : vector<8x1xf32> to vector<8x128xf32>
    %219 = arith.subf %208, %218 : vector<8x128xf32>
    %c0_63 = arith.constant 0 : index
    %c0_64 = arith.constant 0 : index
    %220 = vector.load %arg7[%c0_63, %c0_64] : memref<8x128xf32, #tpu.memory_space<vmem>>, vector<8x128xf32>
    tpu.vector_store %arg7[%c0_63, %c0_64], %219 {strides = array<i32>} : memref<8x128xf32, #tpu.memory_space<vmem>>, vector<8x128xf32>,
    %c0_65 = arith.constant 0 : index
    %c0_66 = arith.constant 0 : index
    %221 = vector.load %arg8[%c0_65, %c0_66] : memref<8x128xf32, #tpu.memory_space<vmem>>, vector<8x128xf32>
    tpu.vector_store %arg8[%c0_65, %c0_66], %203 {strides = array<i32>} : memref<8x128xf32, #tpu.memory_space<vmem>>, vector<8x128xf32>,
    return
  }
  func.func @transform_0(%arg0: i32) -> (i32, i32, i32) {
    %c0_i32 = arith.constant 0 : i32
    %c0_i32_0 = arith.constant 0 : i32
    %c0_i32_1 = arith.constant 0 : i32
    %c0_i32_2 = arith.constant 0 : i32
    return %c0_i32, %c0_i32_0, %c0_i32_1 : i32, i32, i32
  }
  func.func @transform_1(%arg0: i32) -> (i32, i32, i32) {
    %c0_i32 = arith.constant 0 : i32
    %c0_i32_0 = arith.constant 0 : i32
    %c0_i32_1 = arith.constant 0 : i32
    %c0_i32_2 = arith.constant 0 : i32
    return %c0_i32, %c0_i32_0, %c0_i32_1 : i32, i32, i32
  }
  func.func @transform_2(%arg0: i32) -> (i32, i32) {
    %c0_i32 = arith.constant 0 : i32
    %c0_i32_0 = arith.constant 0 : i32
    %c0_i32_1 = arith.constant 0 : i32
    return %c0_i32, %c0_i32_0 : i32, i32
  }
  func.func @transform_3(%arg0: i32) -> (i32, i32) {
    %c0_i32 = arith.constant 0 : i32
    %c0_i32_0 = arith.constant 0 : i32
    %c0_i32_1 = arith.constant 0 : i32
    return %c0_i32, %c0_i32_0 : i32, i32
  }
  func.func @transform_4(%arg0: i32) -> (i32, i32) {
    %c0_i32 = arith.constant 0 : i32
    %c0_i32_0 = arith.constant 0 : i32
    %c0_i32_1 = arith.constant 0 : i32
    return %c0_i32, %c0_i32_0 : i32, i32
  }
  func.func @transform_5(%arg0: i32) -> (i32, i32) {
    %c0_i32 = arith.constant 0 : i32
    %c0_i32_0 = arith.constant 0 : i32
    %c0_i32_1 = arith.constant 0 : i32
    return %c0_i32, %c0_i32_0 : i32, i32
  }
  func.func @transform_6(%arg0: i32) -> (i32, i32) {
    %c0_i32 = arith.constant 0 : i32
    %c0_i32_0 = arith.constant 0 : i32
    %c0_i32_1 = arith.constant 0 : i32
    return %c0_i32, %c0_i32_0 : i32, i32
  }
  func.func @transform_7(%arg0: i32) -> (i32, i32) {
    %c0_i32 = arith.constant 0 : i32
    %c0_i32_0 = arith.constant 0 : i32
    %c0_i32_1 = arith.constant 0 : i32
    return %c0_i32, %c0_i32_0 : i32, i32
  }
}

</mosaic_0001>

<llo_original>
// kernel: forward.1
$region0: #{forward.1}
  #allocation0 [shape = 'u32[]', space=smem, size = 0x4, offset = 0x4, fixed_abs, tag = 'smem constant byte address 0x4 - core index']
  #allocation1 [shape = 'u32[144,128]{1,0:T(1,128)}', space=vmem, size = 0x12000, scoped, tag = 'internal scratch']
  %s0 = inlined_call_operand.vmem [shape: f32[5,8,384], index: 0, kind: input, shape index: {}]
  %s1 = inlined_call_operand.vmem [shape: f32[5,8,128], index: 1, kind: input, shape index: {}]
  %s2 = inlined_call_operand.vmem [shape: f32[128,384], index: 2, kind: input, shape index: {}]
  %s3 = inlined_call_operand.vmem [shape: f32[1,128], index: 3, kind: input, shape index: {}]
  %s4 = inlined_call_operand.vmem [shape: f32[128,128], index: 4, kind: input, shape index: {}]
  %s5 = inlined_call_operand.vmem [shape: f32[1,128], index: 5, kind: input, shape index: {}]
  %s6 = inlined_call_operand.vmem [shape: f32[8,128], index: 6, kind: output, shape index: {0}]
  %s7 = inlined_call_operand.vmem [shape: f32[8,128], index: 7, kind: output, shape index: {1}]
  %8 = xla_tuple %s6, %s7
  %s9 = sld [smem:[#allocation0]]
  $region42: #{forward.1} parent=0
    _
  %s11 = ssub.s32 1, %s9
  %s12 = scalar_select 0, %s11, %s9
  // Predicated region
  $region2: #{forward.1} parent=0 // pred_check
    _
  $region3: #{forward.1} parent=0 // pred_check_branch
    %14 = sbr.rel (0) target = $region5
  $region4: #{forward.1} parent=0 // pred_region
    _
  $region5: #{forward.1} parent=0 // pred_fallthru
    _
  // Predicated region
  $region6: #{forward.1} parent=0 // pred_check
    _
  $region7: #{forward.1} parent=0 // pred_check_branch
    %16 = sbr.rel (0) target = $region9
  $region8: #{forward.1} parent=0 // pred_region
    _
  $region9: #{forward.1} parent=0 // pred_fallthru
    _
  // Predicated region
  $region10: #{forward.1} parent=0 // pred_check
    _
  $region11: #{forward.1} parent=0 // pred_check_branch
    %18 = sbr.rel (0) target = $region13
  $region12: #{forward.1} parent=0 // pred_region
    _
  $region13: #{forward.1} parent=0 // pred_fallthru
    _
  // Predicated region
  $region14: #{forward.1} parent=0 // pred_check
    _
  $region15: #{forward.1} parent=0 // pred_check_branch
    %20 = sbr.rel (0) target = $region17
  $region16: #{forward.1} parent=0 // pred_region
    _
  $region17: #{forward.1} parent=0 // pred_fallthru
    _
  // Predicated region
  $region18: #{forward.1} parent=0 // pred_check
    _
  $region19: #{forward.1} parent=0 // pred_check_branch
    %22 = sbr.rel (0) target = $region21
  $region20: #{forward.1} parent=0 // pred_region
    _
  $region21: #{forward.1} parent=0 // pred_fallthru
    _
  // Predicated region
  $region22: #{forward.1} parent=0 // pred_check
    _
  $region23: #{forward.1} parent=0 // pred_check_branch
    %24 = sbr.rel (0) target = $region25
  $region24: #{forward.1} parent=0 // pred_region
    _
  $region25: #{forward.1} parent=0 // pred_fallthru
    _
  %v25 = vld [vmem:[%s3] sm:$0x1]
  %v27 = vlaneseq
  %v28 = vshrl.u32 %v27, 7
  %v29 = vsub.s32 0, %v28
  %v30 = vrot.slane %v25, %v29
  %v32 = vld [vmem:[%s0] sm:$0xff]
  %v33 = vld [vmem:[%s0 + $0x8] sm:$0xff]
  %v34 = vld [vmem:[%s0 + $0x10] sm:$0xff]
  %v35 = vld [vmem:[%s2] sm:$0xff]
  %v36 = vld [vmem:[%s2 + $0x8] sm:$0xff]
  %v37 = vld [vmem:[%s2 + $0x10] sm:$0xff]
  %v38 = vld [vmem:[%s2 + $0x18] sm:$0xff]
  %v39 = vld [vmem:[%s2 + $0x20] sm:$0xff]
  %v40 = vld [vmem:[%s2 + $0x28] sm:$0xff]
  %v41 = vld [vmem:[%s2 + $0x30] sm:$0xff]
  %v42 = vld [vmem:[%s2 + $0x38] sm:$0xff]
  %v43 = vld [vmem:[%s2 + $0x40] sm:$0xff]
  %v44 = vld [vmem:[%s2 + $0x48] sm:$0xff]
  %v45 = vld [vmem:[%s2 + $0x50] sm:$0xff]
  %v46 = vld [vmem:[%s2 + $0x58] sm:$0xff]
  %v47 = vld [vmem:[%s2 + $0x60] sm:$0xff]
  %v48 = vld [vmem:[%s2 + $0x68] sm:$0xff]
  %v49 = vld [vmem:[%s2 + $0x70] sm:$0xff]
  %v50 = vld [vmem:[%s2 + $0x78] sm:$0xff]
  %v51 = vld [vmem:[%s2 + $0x80] sm:$0xff]
  %v52 = vld [vmem:[%s2 + $0x88] sm:$0xff]
  %v53 = vld [vmem:[%s2 + $0x90] sm:$0xff]
  %v54 = vld [vmem:[%s2 + $0x98] sm:$0xff]
  %v55 = vld [vmem:[%s2 + $0xa0] sm:$0xff]
  %v56 = vld [vmem:[%s2 + $0xa8] sm:$0xff]
  %v57 = vld [vmem:[%s2 + $0xb0] sm:$0xff]
  %v58 = vld [vmem:[%s2 + $0xb8] sm:$0xff]
  %v59 = vld [vmem:[%s2 + $0xc0] sm:$0xff]
  %v60 = vld [vmem:[%s2 + $0xc8] sm:$0xff]
  %v61 = vld [vmem:[%s2 + $0xd0] sm:$0xff]
  %v62 = vld [vmem:[%s2 + $0xd8] sm:$0xff]
  %v63 = vld [vmem:[%s2 + $0xe0] sm:$0xff]
  %v64 = vld [vmem:[%s2 + $0xe8] sm:$0xff]
  %v65 = vld [vmem:[%s2 + $0xf0] sm:$0xff]
  %v66 = vld [vmem:[%s2 + $0xf8] sm:$0xff]
  %v67 = vld [vmem:[%s2 + $0x100] sm:$0xff]
  %v68 = vld [vmem:[%s2 + $0x108] sm:$0xff]
  %v69 = vld [vmem:[%s2 + $0x110] sm:$0xff]
  %v70 = vld [vmem:[%s2 + $0x118] sm:$0xff]
  %v71 = vld [vmem:[%s2 + $0x120] sm:$0xff]
  %v72 = vld [vmem:[%s2 + $0x128] sm:$0xff]
  %v73 = vld [vmem:[%s2 + $0x130] sm:$0xff]
  %v74 = vld [vmem:[%s2 + $0x138] sm:$0xff]
  %v75 = vld [vmem:[%s2 + $0x140] sm:$0xff]
  %v76 = vld [vmem:[%s2 + $0x148] sm:$0xff]
  %v77 = vld [vmem:[%s2 + $0x150] sm:$0xff]
  %v78 = vld [vmem:[%s2 + $0x158] sm:$0xff]
  %v79 = vld [vmem:[%s2 + $0x160] sm:$0xff]
  %v80 = vld [vmem:[%s2 + $0x168] sm:$0xff]
  %v81 = vld [vmem:[%s2 + $0x170] sm:$0xff]
  %v82 = vld [vmem:[%s2 + $0x178] sm:$0xff]
  %83 = vmatprep.subr.mxu0 %v36
  %84 = vmatpush1.msra.mxu0 %v35
  %85 = vmatprep.subr.mxu0 %v39
  %86 = vmatpush1.msra.mxu0 %v38
  %87 = vmatprep.subr.mxu0 %v42
  %88 = vmatpush1.msra.mxu0 %v41
  %89 = vmatprep.subr.mxu0 %v45
  %90 = vmatpush1.msra.mxu0 %v44
  %91 = vmatprep.subr.mxu0 %v48
  %92 = vmatpush1.msra.mxu0 %v47
  %93 = vmatprep.subr.mxu0 %v51
  %94 = vmatpush1.msra.mxu0 %v50
  %95 = vmatprep.subr.mxu0 %v54
  %96 = vmatpush1.msra.mxu0 %v53
  %97 = vmatprep.subr.mxu0 %v57
  %98 = vmatpush1.msra.mxu0 %v56
  %99 = vmatprep.subr.mxu0 %v60
  %100 = vmatpush1.msra.mxu0 %v59
  %101 = vmatprep.subr.mxu0 %v63
  %102 = vmatpush1.msra.mxu0 %v62
  %103 = vmatprep.subr.mxu0 %v66
  %104 = vmatpush1.msra.mxu0 %v65
  %105 = vmatprep.subr.mxu0 %v69
  %106 = vmatpush1.msra.mxu0 %v68
  %107 = vmatprep.subr.mxu0 %v72
  %108 = vmatpush1.msra.mxu0 %v71
  %109 = vmatprep.subr.mxu0 %v75
  %110 = vmatpush1.msra.mxu0 %v74
  %111 = vmatprep.subr.mxu0 %v78
  %112 = vmatpush1.msra.mxu0 %v77
  %113 = vmatprep.subr.mxu0 %v81
  %114 = vmatpush1.msra.mxu0 %v80
  %115 = vmatprep.subr.mxu0 0.0
  %116 = vmatpush1.msra.mxu0 0.0
  %117 = vmatprep.subr.mxu0 0.0
  %118 = vmatpush1.msra.mxu0 0.0
  %119 = vmatprep.subr.mxu0 0.0
  %120 = vmatpush1.msra.mxu0 0.0
  %121 = vmatprep.subr.mxu0 0.0
  %122 = vmatpush1.msra.mxu0 0.0
  %123 = vmatprep.subr.mxu0 0.0
  %124 = vmatpush1.msra.mxu0 0.0
  %125 = vmatprep.subr.mxu0 0.0
  %126 = vmatpush1.msra.mxu0 0.0
  %127 = vmatprep.subr.mxu0 0.0
  %128 = vmatpush1.msra.mxu0 0.0
  %129 = vmatprep.subr.mxu0 0.0
  %130 = vmatpush1.msra.mxu0 0.0
  %131 = vmatprep.subr.mxu0 0.0
  %132 = vmatpush1.msra.mxu0 0.0
  %133 = vmatprep.subr.mxu0 0.0
  %134 = vmatpush1.msra.mxu0 0.0
  %135 = vmatprep.subr.mxu0 0.0
  %136 = vmatpush1.msra.mxu0 0.0
  %137 = vmatprep.subr.mxu0 0.0
  %138 = vmatpush1.msra.mxu0 0.0
  %139 = vmatprep.subr.mxu0 0.0
  %140 = vmatpush1.msra.mxu0 0.0
  %141 = vmatprep.subr.mxu0 0.0
  %142 = vmatpush1.msra.mxu0 0.0
  %143 = vmatprep.subr.mxu0 0.0
  %144 = vmatpush1.msra.mxu0 0.0
  %145 = vmatprep.subr.mxu0 0.0
  %146 = vmatpush1.msra.mxu0 0.0
  %147 = vmatprep.mubr.f32.mxu0 0.0
  %148 = vmatmul.mubr.f32.gmra.mrb[0].mxu0 0.0
  %v149 = vpop.f32.mrb[0].mxu0
  %v150 = vadd.f32 0.0, %v149
  %v151 = vpop.f32.mrb[0].mxu0
  %v152 = vadd.f32 0.0, %v151
  %153 = vdwg.mxu0
  %154 = vmatprep.subr.mxu0 0.0
  %155 = vmatpush1.msra.mxu0 %v37
  %156 = vmatprep.subr.mxu0 0.0
  %157 = vmatpush1.msra.mxu0 %v40
  %158 = vmatprep.subr.mxu0 0.0
  %159 = vmatpush1.msra.mxu0 %v43
  %160 = vmatprep.subr.mxu0 0.0
  %161 = vmatpush1.msra.mxu0 %v46
  %162 = vmatprep.subr.mxu0 0.0
  %163 = vmatpush1.msra.mxu0 %v49
  %164 = vmatprep.subr.mxu0 0.0
  %165 = vmatpush1.msra.mxu0 %v52
  %166 = vmatprep.subr.mxu0 0.0
  %167 = vmatpush1.msra.mxu0 %v55
  %168 = vmatprep.subr.mxu0 0.0
  %169 = vmatpush1.msra.mxu0 %v58
  %170 = vmatprep.subr.mxu0 0.0
  %171 = vmatpush1.msra.mxu0 %v61
  %172 = vmatprep.subr.mxu0 0.0
  %173 = vmatpush1.msra.mxu0 %v64
  %174 = vmatprep.subr.mxu0 0.0
  %175 = vmatpush1.msra.mxu0 %v67
  %176 = vmatprep.subr.mxu0 0.0
  %177 = vmatpush1.msra.mxu0 %v70
  %178 = vmatprep.subr.mxu0 0.0
  %179 = vmatpush1.msra.mxu0 %v73
  %180 = vmatprep.subr.mxu0 0.0
  %181 = vmatpush1.msra.mxu0 %v76
  %182 = vmatprep.subr.mxu0 0.0
  %183 = vmatpush1.msra.mxu0 %v79
  %184 = vmatprep.subr.mxu0 0.0
  %185 = vmatpush1.msra.mxu0 %v82
  %186 = vmatprep.subr.mxu0 0.0
  %187 = vmatpush1.msra.mxu0 0.0
  %188 = vmatprep.subr.mxu0 0.0
  %189 = vmatpush1.msra.mxu0 0.0
  %190 = vmatprep.subr.mxu0 0.0
  %191 = vmatpush1.msra.mxu0 0.0
  %192 = vmatprep.subr.mxu0 0.0
  %193 = vmatpush1.msra.mxu0 0.0
  %194 = vmatprep.subr.mxu0 0.0
  %195 = vmatpush1.msra.mxu0 0.0
  %196 = vmatprep.subr.mxu0 0.0
  %197 = vmatpush1.msra.mxu0 0.0
  %198 = vmatprep.subr.mxu0 0.0
  %199 = vmatpush1.msra.mxu0 0.0
  %200 = vmatprep.subr.mxu0 0.0
  %201 = vmatpush1.msra.mxu0 0.0
  %202 = vmatprep.subr.mxu0 0.0
  %203 = vmatpush1.msra.mxu0 0.0
  %204 = vmatprep.subr.mxu0 0.0
  %205 = vmatpush1.msra.mxu0 0.0
  %206 = vmatprep.subr.mxu0 0.0
  %207 = vmatpush1.msra.mxu0 0.0
  %208 = vmatprep.subr.mxu0 0.0
  %209 = vmatpush1.msra.mxu0 0.0
  %210 = vmatprep.subr.mxu0 0.0
  %211 = vmatpush1.msra.mxu0 0.0
  %212 = vmatprep.subr.mxu0 0.0
  %213 = vmatpush1.msra.mxu0 0.0
  %214 = vmatprep.subr.mxu0 0.0
  %215 = vmatpush1.msra.mxu0 0.0
  %216 = vmatprep.subr.mxu0 0.0
  %217 = vmatpush1.msra.mxu0 0.0
  %218 = vmatprep.mubr.f32.mxu0 0.0
  %219 = vmatmul.mubr.f32.gmra.mrb[0].mxu0 0.0
  %v220 = vpop.f32.mrb[0].mxu0
  %v221 = vadd.f32 0.0, %v220
  %v222 = vpop.f32.mrb[0].mxu0
  %223 = vdwg.mxu0
  %v224 = vadd.f32 %v32, %v150
  %v225 = vxor.u32 %v224, 2147483648
  %v226 = vmul.f32 %v225, 1.442695
  %v227 = vpow.pop %v226
  %v228 = vadd.f32 %v227, 1.0
  %v229 = vrcp.pop %v228
  %v230 = vmul.f32 1.0, %v229
  %v231 = vadd.f32 %v33, %v152
  %v232 = vxor.u32 %v231, 2147483648
  %v233 = vmul.f32 %v232, 1.442695
  %v234 = vpow.pop %v233
  %v235 = vadd.f32 %v234, 1.0
  %v236 = vrcp.pop %v235
  %v237 = vmul.f32 1.0, %v236
  %v238 = vadd.f32 %v221, %v30
  %v239 = vmul.f32 %v230, %v238
  %v240 = vadd.f32 %v34, %v239
  %v241 = vtanh.pop %v240
  %v242 = vsub.f32 1.0, %v237
  %v243 = vmul.f32 %v242, %v241
  %v244 = vmul.f32 %v237, 0.0
  %v245 = vadd.f32 %v243, %v244
  %v246 = vld [vmem:[%s1] sm:$0xff]
  %v247 = vmul.f32 %v246, %v245
  %v248 = vsub.f32 1.0, %v246
  %v249 = vmul.f32 %v248, 0.0
  %v250 = vadd.f32 %v247, %v249
  %s251 = scalar_lea.vmem %s0, 24
  %v252 = vld [vmem:[%s251] sm:$0xff]
  %v253 = vld [vmem:[%s251 + $0x8] sm:$0xff]
  %v254 = vld [vmem:[%s251 + $0x10] sm:$0xff]
  %255 = vmatprep.subr.mxu0 %v36
  %256 = vmatpush1.msra.mxu0 %v35
  %257 = vmatprep.subr.mxu0 %v39
  %258 = vmatpush1.msra.mxu0 %v38
  %259 = vmatprep.subr.mxu0 %v42
  %260 = vmatpush1.msra.mxu0 %v41
  %261 = vmatprep.subr.mxu0 %v45
  %262 = vmatpush1.msra.mxu0 %v44
  %263 = vmatprep.subr.mxu0 %v48
  %264 = vmatpush1.msra.mxu0 %v47
  %265 = vmatprep.subr.mxu0 %v51
  %266 = vmatpush1.msra.mxu0 %v50
  %267 = vmatprep.subr.mxu0 %v54
  %268 = vmatpush1.msra.mxu0 %v53
  %269 = vmatprep.subr.mxu0 %v57
  %270 = vmatpush1.msra.mxu0 %v56
  %271 = vmatprep.subr.mxu0 %v60
  %272 = vmatpush1.msra.mxu0 %v59
  %273 = vmatprep.subr.mxu0 %v63
  %274 = vmatpush1.msra.mxu0 %v62
  %275 = vmatprep.subr.mxu0 %v66
  %276 = vmatpush1.msra.mxu0 %v65
  %277 = vmatprep.subr.mxu0 %v69
  %278 = vmatpush1.msra.mxu0 %v68
  %279 = vmatprep.subr.mxu0 %v72
  %280 = vmatpush1.msra.mxu0 %v71
  %281 = vmatprep.subr.mxu0 %v75
  %282 = vmatpush1.msra.mxu0 %v74
  %283 = vmatprep.subr.mxu0 %v78
  %284 = vmatpush1.msra.mxu0 %v77
  %285 = vmatprep.subr.mxu0 %v81
  %286 = vmatpush1.msra.mxu0 %v80
  %287 = vmatprep.subr.mxu0 0.0
  %288 = vmatpush1.msra.mxu0 0.0
  %289 = vmatprep.subr.mxu0 0.0
  %290 = vmatpush1.msra.mxu0 0.0
  %291 = vmatprep.subr.mxu0 0.0
  %292 = vmatpush1.msra.mxu0 0.0
  %293 = vmatprep.subr.mxu0 0.0
  %294 = vmatpush1.msra.mxu0 0.0
  %295 = vmatprep.subr.mxu0 0.0
  %296 = vmatpush1.msra.mxu0 0.0
  %297 = vmatprep.subr.mxu0 0.0
  %298 = vmatpush1.msra.mxu0 0.0
  %299 = vmatprep.subr.mxu0 0.0
  %300 = vmatpush1.msra.mxu0 0.0
  %301 = vmatprep.subr.mxu0 0.0
  %302 = vmatpush1.msra.mxu0 0.0
  %303 = vmatprep.subr.mxu0 0.0
  %304 = vmatpush1.msra.mxu0 0.0
  %305 = vmatprep.subr.mxu0 0.0
  %306 = vmatpush1.msra.mxu0 0.0
  %307 = vmatprep.subr.mxu0 0.0
  %308 = vmatpush1.msra.mxu0 0.0
  %309 = vmatprep.subr.mxu0 0.0
  %310 = vmatpush1.msra.mxu0 0.0
  %311 = vmatprep.subr.mxu0 0.0
  %312 = vmatpush1.msra.mxu0 0.0
  %313 = vmatprep.subr.mxu0 0.0
  %314 = vmatpush1.msra.mxu0 0.0
  %315 = vmatprep.subr.mxu0 0.0
  %316 = vmatpush1.msra.mxu0 0.0
  %317 = vmatprep.subr.mxu0 0.0
  %318 = vmatpush1.msra.mxu0 0.0
  %319 = vmatprep.mubr.f32.mxu0 0.0
  %320 = vmatmul.mubr.f32.gmra.mrb[0].mxu0 %v250
  %v321 = vpop.f32.mrb[0].mxu0
  %v322 = vadd.f32 0.0, %v321
  %v323 = vpop.f32.mrb[0].mxu0
  %v324 = vadd.f32 0.0, %v323
  %325 = vdwg.mxu0
  %326 = vmatprep.subr.mxu0 0.0
  %327 = vmatpush1.msra.mxu0 %v37
  %328 = vmatprep.subr.mxu0 0.0
  %329 = vmatpush1.msra.mxu0 %v40
  %330 = vmatprep.subr.mxu0 0.0
  %331 = vmatpush1.msra.mxu0 %v43
  %332 = vmatprep.subr.mxu0 0.0
  %333 = vmatpush1.msra.mxu0 %v46
  %334 = vmatprep.subr.mxu0 0.0
  %335 = vmatpush1.msra.mxu0 %v49
  %336 = vmatprep.subr.mxu0 0.0
  %337 = vmatpush1.msra.mxu0 %v52
  %338 = vmatprep.subr.mxu0 0.0
  %339 = vmatpush1.msra.mxu0 %v55
  %340 = vmatprep.subr.mxu0 0.0
  %341 = vmatpush1.msra.mxu0 %v58
  %342 = vmatprep.subr.mxu0 0.0
  %343 = vmatpush1.msra.mxu0 %v61
  %344 = vmatprep.subr.mxu0 0.0
  %345 = vmatpush1.msra.mxu0 %v64
  %346 = vmatprep.subr.mxu0 0.0
  %347 = vmatpush1.msra.mxu0 %v67
  %348 = vmatprep.subr.mxu0 0.0
  %349 = vmatpush1.msra.mxu0 %v70
  %350 = vmatprep.subr.mxu0 0.0
  %351 = vmatpush1.msra.mxu0 %v73
  %352 = vmatprep.subr.mxu0 0.0
  %353 = vmatpush1.msra.mxu0 %v76
  %354 = vmatprep.subr.mxu0 0.0
  %355 = vmatpush1.msra.mxu0 %v79
  %356 = vmatprep.subr.mxu0 0.0
  %357 = vmatpush1.msra.mxu0 %v82
  %358 = vmatprep.subr.mxu0 0.0
  %359 = vmatpush1.msra.mxu0 0.0
  %360 = vmatprep.subr.mxu0 0.0
  %361 = vmatpush1.msra.mxu0 0.0
  %362 = vmatprep.subr.mxu0 0.0
  %363 = vmatpush1.msra.mxu0 0.0
  %364 = vmatprep.subr.mxu0 0.0
  %365 = vmatpush1.msra.mxu0 0.0
  %366 = vmatprep.subr.mxu0 0.0
  %367 = vmatpush1.msra.mxu0 0.0
  %368 = vmatprep.subr.mxu0 0.0
  %369 = vmatpush1.msra.mxu0 0.0
  %370 = vmatprep.subr.mxu0 0.0
  %371 = vmatpush1.msra.mxu0 0.0
  %372 = vmatprep.subr.mxu0 0.0
  %373 = vmatpush1.msra.mxu0 0.0
  %374 = vmatprep.subr.mxu0 0.0
  %375 = vmatpush1.msra.mxu0 0.0
  %376 = vmatprep.subr.mxu0 0.0
  %377 = vmatpush1.msra.mxu0 0.0
  %378 = vmatprep.subr.mxu0 0.0
  %379 = vmatpush1.msra.mxu0 0.0
  %380 = vmatprep.subr.mxu0 0.0
  %381 = vmatpush1.msra.mxu0 0.0
  %382 = vmatprep.subr.mxu0 0.0
  %383 = vmatpush1.msra.mxu0 0.0
  %384 = vmatprep.subr.mxu0 0.0
  %385 = vmatpush1.msra.mxu0 0.0
  %386 = vmatprep.subr.mxu0 0.0
  %387 = vmatpush1.msra.mxu0 0.0
  %388 = vmatprep.subr.mxu0 0.0
  %389 = vmatpush1.msra.mxu0 0.0
  %390 = vmatprep.mubr.f32.mxu0 0.0
  %391 = vmatmul.mubr.f32.gmra.mrb[0].mxu0 %v250
  %v392 = vpop.f32.mrb[0].mxu0
  %v393 = vadd.f32 0.0, %v392
  %v394 = vpop.f32.mrb[0].mxu0
  %395 = vdwg.mxu0
  %v396 = vadd.f32 %v252, %v322
  %v397 = vxor.u32 %v396, 2147483648
  %v398 = vmul.f32 %v397, 1.442695
  %v399 = vpow.pop %v398
  %v400 = vadd.f32 %v399, 1.0
  %v401 = vrcp.pop %v400
  %v402 = vmul.f32 1.0, %v401
  %v403 = vadd.f32 %v253, %v324
  %v404 = vxor.u32 %v403, 2147483648
  %v405 = vmul.f32 %v404, 1.442695
  %v406 = vpow.pop %v405
  %v407 = vadd.f32 %v406, 1.0
  %v408 = vrcp.pop %v407
  %v409 = vmul.f32 1.0, %v408
  %v410 = vadd.f32 %v393, %v30
  %v411 = vmul.f32 %v402, %v410
  %v412 = vadd.f32 %v254, %v411
  %v413 = vtanh.pop %v412
  %v414 = vsub.f32 1.0, %v409
  %v415 = vmul.f32 %v414, %v413
  %v416 = vmul.f32 %v409, %v250
  %v417 = vadd.f32 %v415, %v416
  %s418 = scalar_lea.vmem %s1, 8
  %v419 = vld [vmem:[%s418] sm:$0xff]
  %v420 = vmul.f32 %v419, %v417
  %v421 = vsub.f32 1.0, %v419
  %v422 = vmul.f32 %v421, %v250
  %v423 = vadd.f32 %v420, %v422
  %s424 = scalar_lea.vmem %s0, 48
  %v425 = vld [vmem:[%s424] sm:$0xff]
  %v426 = vld [vmem:[%s424 + $0x8] sm:$0xff]
  %v427 = vld [vmem:[%s424 + $0x10] sm:$0xff]
  %428 = vmatprep.subr.mxu0 %v36
  %429 = vmatpush1.msra.mxu0 %v35
  %430 = vmatprep.subr.mxu0 %v39
  %431 = vmatpush1.msra.mxu0 %v38
  %432 = vmatprep.subr.mxu0 %v42
  %433 = vmatpush1.msra.mxu0 %v41
  %434 = vmatprep.subr.mxu0 %v45
  %435 = vmatpush1.msra.mxu0 %v44
  %436 = vmatprep.subr.mxu0 %v48
  %437 = vmatpush1.msra.mxu0 %v47
  %438 = vmatprep.subr.mxu0 %v51
  %439 = vmatpush1.msra.mxu0 %v50
  %440 = vmatprep.subr.mxu0 %v54
  %441 = vmatpush1.msra.mxu0 %v53
  %442 = vmatprep.subr.mxu0 %v57
  %443 = vmatpush1.msra.mxu0 %v56
  %444 = vmatprep.subr.mxu0 %v60
  %445 = vmatpush1.msra.mxu0 %v59
  %446 = vmatprep.subr.mxu0 %v63
  %447 = vmatpush1.msra.mxu0 %v62
  %448 = vmatprep.subr.mxu0 %v66
  %449 = vmatpush1.msra.mxu0 %v65
  %450 = vmatprep.subr.mxu0 %v69
  %451 = vmatpush1.msra.mxu0 %v68
  %452 = vmatprep.subr.mxu0 %v72
  %453 = vmatpush1.msra.mxu0 %v71
  %454 = vmatprep.subr.mxu0 %v75
  %455 = vmatpush1.msra.mxu0 %v74
  %456 = vmatprep.subr.mxu0 %v78
  %457 = vmatpush1.msra.mxu0 %v77
  %458 = vmatprep.subr.mxu0 %v81
  %459 = vmatpush1.msra.mxu0 %v80
  %460 = vmatprep.subr.mxu0 0.0
  %461 = vmatpush1.msra.mxu0 0.0
  %462 = vmatprep.subr.mxu0 0.0
  %463 = vmatpush1.msra.mxu0 0.0
  %464 = vmatprep.subr.mxu0 0.0
  %465 = vmatpush1.msra.mxu0 0.0
  %466 = vmatprep.subr.mxu0 0.0
  %467 = vmatpush1.msra.mxu0 0.0
  %468 = vmatprep.subr.mxu0 0.0
  %469 = vmatpush1.msra.mxu0 0.0
  %470 = vmatprep.subr.mxu0 0.0
  %471 = vmatpush1.msra.mxu0 0.0
  %472 = vmatprep.subr.mxu0 0.0
  %473 = vmatpush1.msra.mxu0 0.0
  %474 = vmatprep.subr.mxu0 0.0
  %475 = vmatpush1.msra.mxu0 0.0
  %476 = vmatprep.subr.mxu0 0.0
  %477 = vmatpush1.msra.mxu0 0.0
  %478 = vmatprep.subr.mxu0 0.0
  %479 = vmatpush1.msra.mxu0 0.0
  %480 = vmatprep.subr.mxu0 0.0
  %481 = vmatpush1.msra.mxu0 0.0
  %482 = vmatprep.subr.mxu0 0.0
  %483 = vmatpush1.msra.mxu0 0.0
  %484 = vmatprep.subr.mxu0 0.0
  %485 = vmatpush1.msra.mxu0 0.0
  %486 = vmatprep.subr.mxu0 0.0
  %487 = vmatpush1.msra.mxu0 0.0
  %488 = vmatprep.subr.mxu0 0.0
  %489 = vmatpush1.msra.mxu0 0.0
  %490 = vmatprep.subr.mxu0 0.0
  %491 = vmatpush1.msra.mxu0 0.0
  %492 = vmatprep.mubr.f32.mxu0 0.0
  %493 = vmatmul.mubr.f32.gmra.mrb[0].mxu0 %v423
  %v494 = vpop.f32.mrb[0].mxu0
  %v495 = vadd.f32 0.0, %v494
  %v496 = vpop.f32.mrb[0].mxu0
  %v497 = vadd.f32 0.0, %v496
  %498 = vdwg.mxu0
  %499 = vmatprep.subr.mxu0 0.0
  %500 = vmatpush1.msra.mxu0 %v37
  %501 = vmatprep.subr.mxu0 0.0
  %502 = vmatpush1.msra.mxu0 %v40
  %503 = vmatprep.subr.mxu0 0.0
  %504 = vmatpush1.msra.mxu0 %v43
  %505 = vmatprep.subr.mxu0 0.0
  %506 = vmatpush1.msra.mxu0 %v46
  %507 = vmatprep.subr.mxu0 0.0
  %508 = vmatpush1.msra.mxu0 %v49
  %509 = vmatprep.subr.mxu0 0.0
  %510 = vmatpush1.msra.mxu0 %v52
  %511 = vmatprep.subr.mxu0 0.0
  %512 = vmatpush1.msra.mxu0 %v55
  %513 = vmatprep.subr.mxu0 0.0
  %514 = vmatpush1.msra.mxu0 %v58
  %515 = vmatprep.subr.mxu0 0.0
  %516 = vmatpush1.msra.mxu0 %v61
  %517 = vmatprep.subr.mxu0 0.0
  %518 = vmatpush1.msra.mxu0 %v64
  %519 = vmatprep.subr.mxu0 0.0
  %520 = vmatpush1.msra.mxu0 %v67
  %521 = vmatprep.subr.mxu0 0.0
  %522 = vmatpush1.msra.mxu0 %v70
  %523 = vmatprep.subr.mxu0 0.0
  %524 = vmatpush1.msra.mxu0 %v73
  %525 = vmatprep.subr.mxu0 0.0
  %526 = vmatpush1.msra.mxu0 %v76
  %527 = vmatprep.subr.mxu0 0.0
  %528 = vmatpush1.msra.mxu0 %v79
  %529 = vmatprep.subr.mxu0 0.0
  %530 = vmatpush1.msra.mxu0 %v82
  %531 = vmatprep.subr.mxu0 0.0
  %532 = vmatpush1.msra.mxu0 0.0
  %533 = vmatprep.subr.mxu0 0.0
  %534 = vmatpush1.msra.mxu0 0.0
  %535 = vmatprep.subr.mxu0 0.0
  %536 = vmatpush1.msra.mxu0 0.0
  %537 = vmatprep.subr.mxu0 0.0
  %538 = vmatpush1.msra.mxu0 0.0
  %539 = vmatprep.subr.mxu0 0.0
  %540 = vmatpush1.msra.mxu0 0.0
  %541 = vmatprep.subr.mxu0 0.0
  %542 = vmatpush1.msra.mxu0 0.0
  %543 = vmatprep.subr.mxu0 0.0
  %544 = vmatpush1.msra.mxu0 0.0
  %545 = vmatprep.subr.mxu0 0.0
  %546 = vmatpush1.msra.mxu0 0.0
  %547 = vmatprep.subr.mxu0 0.0
  %548 = vmatpush1.msra.mxu0 0.0
  %549 = vmatprep.subr.mxu0 0.0
  %550 = vmatpush1.msra.mxu0 0.0
  %551 = vmatprep.subr.mxu0 0.0
  %552 = vmatpush1.msra.mxu0 0.0
  %553 = vmatprep.subr.mxu0 0.0
  %554 = vmatpush1.msra.mxu0 0.0
  %555 = vmatprep.subr.mxu0 0.0
  %556 = vmatpush1.msra.mxu0 0.0
  %557 = vmatprep.subr.mxu0 0.0
  %558 = vmatpush1.msra.mxu0 0.0
  %559 = vmatprep.subr.mxu0 0.0
  %560 = vmatpush1.msra.mxu0 0.0
  %561 = vmatprep.subr.mxu0 0.0
  %562 = vmatpush1.msra.mxu0 0.0
  %563 = vmatprep.mubr.f32.mxu0 0.0
  %564 = vmatmul.mubr.f32.gmra.mrb[0].mxu0 %v423
  %v565 = vpop.f32.mrb[0].mxu0
  %v566 = vadd.f32 0.0, %v565
  %v567 = vpop.f32.mrb[0].mxu0
  %568 = vdwg.mxu0
  %v569 = vadd.f32 %v425, %v495
  %v570 = vxor.u32 %v569, 2147483648
  %v571 = vmul.f32 %v570, 1.442695
  %v572 = vpow.pop %v571
  %v573 = vadd.f32 %v572, 1.0
  %v574 = vrcp.pop %v573
  %v575 = vmul.f32 1.0, %v574
  %v576 = vadd.f32 %v426, %v497
  %v577 = vxor.u32 %v576, 2147483648
  %v578 = vmul.f32 %v577, 1.442695
  %v579 = vpow.pop %v578
  %v580 = vadd.f32 %v579, 1.0
  %v581 = vrcp.pop %v580
  %v582 = vmul.f32 1.0, %v581
  %v583 = vadd.f32 %v566, %v30
  %v584 = vmul.f32 %v575, %v583
  %v585 = vadd.f32 %v427, %v584
  %v586 = vtanh.pop %v585
  %v587 = vsub.f32 1.0, %v582
  %v588 = vmul.f32 %v587, %v586
  %v589 = vmul.f32 %v582, %v423
  %v590 = vadd.f32 %v588, %v589
  %s591 = scalar_lea.vmem %s1, 16
  %v592 = vld [vmem:[%s591] sm:$0xff]
  %v593 = vmul.f32 %v592, %v590
  %v594 = vsub.f32 1.0, %v592
  %v595 = vmul.f32 %v594, %v423
  %v596 = vadd.f32 %v593, %v595
  %s597 = scalar_lea.vmem %s0, 72
  %v598 = vld [vmem:[%s597] sm:$0xff]
  %v599 = vld [vmem:[%s597 + $0x8] sm:$0xff]
  %v600 = vld [vmem:[%s597 + $0x10] sm:$0xff]
  %601 = vmatprep.subr.mxu0 %v36
  %602 = vmatpush1.msra.mxu0 %v35
  %603 = vmatprep.subr.mxu0 %v39
  %604 = vmatpush1.msra.mxu0 %v38
  %605 = vmatprep.subr.mxu0 %v42
  %606 = vmatpush1.msra.mxu0 %v41
  %607 = vmatprep.subr.mxu0 %v45
  %608 = vmatpush1.msra.mxu0 %v44
  %609 = vmatprep.subr.mxu0 %v48
  %610 = vmatpush1.msra.mxu0 %v47
  %611 = vmatprep.subr.mxu0 %v51
  %612 = vmatpush1.msra.mxu0 %v50
  %613 = vmatprep.subr.mxu0 %v54
  %614 = vmatpush1.msra.mxu0 %v53
  %615 = vmatprep.subr.mxu0 %v57
  %616 = vmatpush1.msra.mxu0 %v56
  %617 = vmatprep.subr.mxu0 %v60
  %618 = vmatpush1.msra.mxu0 %v59
  %619 = vmatprep.subr.mxu0 %v63
  %620 = vmatpush1.msra.mxu0 %v62
  %621 = vmatprep.subr.mxu0 %v66
  %622 = vmatpush1.msra.mxu0 %v65
  %623 = vmatprep.subr.mxu0 %v69
  %624 = vmatpush1.msra.mxu0 %v68
  %625 = vmatprep.subr.mxu0 %v72
  %626 = vmatpush1.msra.mxu0 %v71
  %627 = vmatprep.subr.mxu0 %v75
  %628 = vmatpush1.msra.mxu0 %v74
  %629 = vmatprep.subr.mxu0 %v78
  %630 = vmatpush1.msra.mxu0 %v77
  %631 = vmatprep.subr.mxu0 %v81
  %632 = vmatpush1.msra.mxu0 %v80
  %633 = vmatprep.subr.mxu0 0.0
  %634 = vmatpush1.msra.mxu0 0.0
  %635 = vmatprep.subr.mxu0 0.0
  %636 = vmatpush1.msra.mxu0 0.0
  %637 = vmatprep.subr.mxu0 0.0
  %638 = vmatpush1.msra.mxu0 0.0
  %639 = vmatprep.subr.mxu0 0.0
  %640 = vmatpush1.msra.mxu0 0.0
  %641 = vmatprep.subr.mxu0 0.0
  %642 = vmatpush1.msra.mxu0 0.0
  %643 = vmatprep.subr.mxu0 0.0
  %644 = vmatpush1.msra.mxu0 0.0
  %645 = vmatprep.subr.mxu0 0.0
  %646 = vmatpush1.msra.mxu0 0.0
  %647 = vmatprep.subr.mxu0 0.0
  %648 = vmatpush1.msra.mxu0 0.0
  %649 = vmatprep.subr.mxu0 0.0
  %650 = vmatpush1.msra.mxu0 0.0
  %651 = vmatprep.subr.mxu0 0.0
  %652 = vmatpush1.msra.mxu0 0.0
  %653 = vmatprep.subr.mxu0 0.0
  %654 = vmatpush1.msra.mxu0 0.0
  %655 = vmatprep.subr.mxu0 0.0
  %656 = vmatpush1.msra.mxu0 0.0
  %657 = vmatprep.subr.mxu0 0.0
  %658 = vmatpush1.msra.mxu0 0.0
  %659 = vmatprep.subr.mxu0 0.0
  %660 = vmatpush1.msra.mxu0 0.0
  %661 = vmatprep.subr.mxu0 0.0
  %662 = vmatpush1.msra.mxu0 0.0
  %663 = vmatprep.subr.mxu0 0.0
  %664 = vmatpush1.msra.mxu0 0.0
  %665 = vmatprep.mubr.f32.mxu0 0.0
  %666 = vmatmul.mubr.f32.gmra.mrb[0].mxu0 %v596
  %v667 = vpop.f32.mrb[0].mxu0
  %v668 = vadd.f32 0.0, %v667
  %v669 = vpop.f32.mrb[0].mxu0
  %v670 = vadd.f32 0.0, %v669
  %671 = vdwg.mxu0
  %672 = vmatprep.subr.mxu0 0.0
  %673 = vmatpush1.msra.mxu0 %v37
  %674 = vmatprep.subr.mxu0 0.0
  %675 = vmatpush1.msra.mxu0 %v40
  %676 = vmatprep.subr.mxu0 0.0
  %677 = vmatpush1.msra.mxu0 %v43
  %678 = vmatprep.subr.mxu0 0.0
  %679 = vmatpush1.msra.mxu0 %v46
  %680 = vmatprep.subr.mxu0 0.0
  %681 = vmatpush1.msra.mxu0 %v49
  %682 = vmatprep.subr.mxu0 0.0
  %683 = vmatpush1.msra.mxu0 %v52
  %684 = vmatprep.subr.mxu0 0.0
  %685 = vmatpush1.msra.mxu0 %v55
  %686 = vmatprep.subr.mxu0 0.0
  %687 = vmatpush1.msra.mxu0 %v58
  %688 = vmatprep.subr.mxu0 0.0
  %689 = vmatpush1.msra.mxu0 %v61
  %690 = vmatprep.subr.mxu0 0.0
  %691 = vmatpush1.msra.mxu0 %v64
  %692 = vmatprep.subr.mxu0 0.0
  %693 = vmatpush1.msra.mxu0 %v67
  %694 = vmatprep.subr.mxu0 0.0
  %695 = vmatpush1.msra.mxu0 %v70
  %696 = vmatprep.subr.mxu0 0.0
  %697 = vmatpush1.msra.mxu0 %v73
  %698 = vmatprep.subr.mxu0 0.0
  %699 = vmatpush1.msra.mxu0 %v76
  %700 = vmatprep.subr.mxu0 0.0
  %701 = vmatpush1.msra.mxu0 %v79
  %702 = vmatprep.subr.mxu0 0.0
  %703 = vmatpush1.msra.mxu0 %v82
  %704 = vmatprep.subr.mxu0 0.0
  %705 = vmatpush1.msra.mxu0 0.0
  %706 = vmatprep.subr.mxu0 0.0
  %707 = vmatpush1.msra.mxu0 0.0
  %708 = vmatprep.subr.mxu0 0.0
  %709 = vmatpush1.msra.mxu0 0.0
  %710 = vmatprep.subr.mxu0 0.0
  %711 = vmatpush1.msra.mxu0 0.0
  %712 = vmatprep.subr.mxu0 0.0
  %713 = vmatpush1.msra.mxu0 0.0
  %714 = vmatprep.subr.mxu0 0.0
  %715 = vmatpush1.msra.mxu0 0.0
  %716 = vmatprep.subr.mxu0 0.0
  %717 = vmatpush1.msra.mxu0 0.0
  %718 = vmatprep.subr.mxu0 0.0
  %719 = vmatpush1.msra.mxu0 0.0
  %720 = vmatprep.subr.mxu0 0.0
  %721 = vmatpush1.msra.mxu0 0.0
  %722 = vmatprep.subr.mxu0 0.0
  %723 = vmatpush1.msra.mxu0 0.0
  %724 = vmatprep.subr.mxu0 0.0
  %725 = vmatpush1.msra.mxu0 0.0
  %726 = vmatprep.subr.mxu0 0.0
  %727 = vmatpush1.msra.mxu0 0.0
  %728 = vmatprep.subr.mxu0 0.0
  %729 = vmatpush1.msra.mxu0 0.0
  %730 = vmatprep.subr.mxu0 0.0
  %731 = vmatpush1.msra.mxu0 0.0
  %732 = vmatprep.subr.mxu0 0.0
  %733 = vmatpush1.msra.mxu0 0.0
  %734 = vmatprep.subr.mxu0 0.0
  %735 = vmatpush1.msra.mxu0 0.0
  %736 = vmatprep.mubr.f32.mxu0 0.0
  %737 = vmatmul.mubr.f32.gmra.mrb[0].mxu0 %v596
  %v738 = vpop.f32.mrb[0].mxu0
  %v739 = vadd.f32 0.0, %v738
  %v740 = vpop.f32.mrb[0].mxu0
  %741 = vdwg.mxu0
  %v742 = vadd.f32 %v598, %v668
  %v743 = vxor.u32 %v742, 2147483648
  %v744 = vmul.f32 %v743, 1.442695
  %v745 = vpow.pop %v744
  %v746 = vadd.f32 %v745, 1.0
  %v747 = vrcp.pop %v746
  %v748 = vmul.f32 1.0, %v747
  %v749 = vadd.f32 %v599, %v670
  %v750 = vxor.u32 %v749, 2147483648
  %v751 = vmul.f32 %v750, 1.442695
  %v752 = vpow.pop %v751
  %v753 = vadd.f32 %v752, 1.0
  %v754 = vrcp.pop %v753
  %v755 = vmul.f32 1.0, %v754
  %v756 = vadd.f32 %v739, %v30
  %v757 = vmul.f32 %v748, %v756
  %v758 = vadd.f32 %v600, %v757
  %v759 = vtanh.pop %v758
  %v760 = vsub.f32 1.0, %v755
  %v761 = vmul.f32 %v760, %v759
  %v762 = vmul.f32 %v755, %v596
  %v763 = vadd.f32 %v761, %v762
  %s764 = scalar_lea.vmem %s1, 24
  %v765 = vld [vmem:[%s764] sm:$0xff]
  %v766 = vmul.f32 %v765, %v763
  %v767 = vsub.f32 1.0, %v765
  %v768 = vmul.f32 %v767, %v596
  %v769 = vadd.f32 %v766, %v768
  %s770 = scalar_lea.vmem %s0, 96
  %v771 = vld [vmem:[%s770] sm:$0xff]
  %v772 = vld [vmem:[%s770 + $0x8] sm:$0xff]
  %v773 = vld [vmem:[%s770 + $0x10] sm:$0xff]
  %774 = vmatprep.subr.mxu0 %v36
  %775 = vmatpush1.msra.mxu0 %v35
  %776 = vmatprep.subr.mxu0 %v39
  %777 = vmatpush1.msra.mxu0 %v38
  %778 = vmatprep.subr.mxu0 %v42
  %779 = vmatpush1.msra.mxu0 %v41
  %780 = vmatprep.subr.mxu0 %v45
  %781 = vmatpush1.msra.mxu0 %v44
  %782 = vmatprep.subr.mxu0 %v48
  %783 = vmatpush1.msra.mxu0 %v47
  %784 = vmatprep.subr.mxu0 %v51
  %785 = vmatpush1.msra.mxu0 %v50
  %786 = vmatprep.subr.mxu0 %v54
  %787 = vmatpush1.msra.mxu0 %v53
  %788 = vmatprep.subr.mxu0 %v57
  %789 = vmatpush1.msra.mxu0 %v56
  %790 = vmatprep.subr.mxu0 %v60
  %791 = vmatpush1.msra.mxu0 %v59
  %792 = vmatprep.subr.mxu0 %v63
  %793 = vmatpush1.msra.mxu0 %v62
  %794 = vmatprep.subr.mxu0 %v66
  %795 = vmatpush1.msra.mxu0 %v65
  %796 = vmatprep.subr.mxu0 %v69
  %797 = vmatpush1.msra.mxu0 %v68
  %798 = vmatprep.subr.mxu0 %v72
  %799 = vmatpush1.msra.mxu0 %v71
  %800 = vmatprep.subr.mxu0 %v75
  %801 = vmatpush1.msra.mxu0 %v74
  %802 = vmatprep.subr.mxu0 %v78
  %803 = vmatpush1.msra.mxu0 %v77
  %804 = vmatprep.subr.mxu0 %v81
  %805 = vmatpush1.msra.mxu0 %v80
  %806 = vmatprep.subr.mxu0 0.0
  %807 = vmatpush1.msra.mxu0 0.0
  %808 = vmatprep.subr.mxu0 0.0
  %809 = vmatpush1.msra.mxu0 0.0
  %810 = vmatprep.subr.mxu0 0.0
  %811 = vmatpush1.msra.mxu0 0.0
  %812 = vmatprep.subr.mxu0 0.0
  %813 = vmatpush1.msra.mxu0 0.0
  %814 = vmatprep.subr.mxu0 0.0
  %815 = vmatpush1.msra.mxu0 0.0
  %816 = vmatprep.subr.mxu0 0.0
  %817 = vmatpush1.msra.mxu0 0.0
  %818 = vmatprep.subr.mxu0 0.0
  %819 = vmatpush1.msra.mxu0 0.0
  %820 = vmatprep.subr.mxu0 0.0
  %821 = vmatpush1.msra.mxu0 0.0
  %822 = vmatprep.subr.mxu0 0.0
  %823 = vmatpush1.msra.mxu0 0.0
  %824 = vmatprep.subr.mxu0 0.0
  %825 = vmatpush1.msra.mxu0 0.0
  %826 = vmatprep.subr.mxu0 0.0
  %827 = vmatpush1.msra.mxu0 0.0
  %828 = vmatprep.subr.mxu0 0.0
  %829 = vmatpush1.msra.mxu0 0.0
  %830 = vmatprep.subr.mxu0 0.0
  %831 = vmatpush1.msra.mxu0 0.0
  %832 = vmatprep.subr.mxu0 0.0
  %833 = vmatpush1.msra.mxu0 0.0
  %834 = vmatprep.subr.mxu0 0.0
  %835 = vmatpush1.msra.mxu0 0.0
  %836 = vmatprep.subr.mxu0 0.0
  %837 = vmatpush1.msra.mxu0 0.0
  %838 = vmatprep.mubr.f32.mxu0 0.0
  %839 = vmatmul.mubr.f32.gmra.mrb[0].mxu0 %v769
  %v840 = vpop.f32.mrb[0].mxu0
  %v841 = vadd.f32 0.0, %v840
  %v842 = vpop.f32.mrb[0].mxu0
  %v843 = vadd.f32 0.0, %v842
  %844 = vdwg.mxu0
  %845 = vmatprep.subr.mxu0 0.0
  %846 = vmatpush1.msra.mxu0 %v37
  %847 = vmatprep.subr.mxu0 0.0
  %848 = vmatpush1.msra.mxu0 %v40
  %849 = vmatprep.subr.mxu0 0.0
  %850 = vmatpush1.msra.mxu0 %v43
  %851 = vmatprep.subr.mxu0 0.0
  %852 = vmatpush1.msra.mxu0 %v46
  %853 = vmatprep.subr.mxu0 0.0
  %854 = vmatpush1.msra.mxu0 %v49
  %855 = vmatprep.subr.mxu0 0.0
  %856 = vmatpush1.msra.mxu0 %v52
  %857 = vmatprep.subr.mxu0 0.0
  %858 = vmatpush1.msra.mxu0 %v55
  %859 = vmatprep.subr.mxu0 0.0
  %860 = vmatpush1.msra.mxu0 %v58
  %861 = vmatprep.subr.mxu0 0.0
  %862 = vmatpush1.msra.mxu0 %v61
  %863 = vmatprep.subr.mxu0 0.0
  %864 = vmatpush1.msra.mxu0 %v64
  %865 = vmatprep.subr.mxu0 0.0
  %866 = vmatpush1.msra.mxu0 %v67
  %867 = vmatprep.subr.mxu0 0.0
  %868 = vmatpush1.msra.mxu0 %v70
  %869 = vmatprep.subr.mxu0 0.0
  %870 = vmatpush1.msra.mxu0 %v73
  %871 = vmatprep.subr.mxu0 0.0
  %872 = vmatpush1.msra.mxu0 %v76
  %873 = vmatprep.subr.mxu0 0.0
  %874 = vmatpush1.msra.mxu0 %v79
  %875 = vmatprep.subr.mxu0 0.0
  %876 = vmatpush1.msra.mxu0 %v82
  %877 = vmatprep.subr.mxu0 0.0
  %878 = vmatpush1.msra.mxu0 0.0
  %879 = vmatprep.subr.mxu0 0.0
  %880 = vmatpush1.msra.mxu0 0.0
  %881 = vmatprep.subr.mxu0 0.0
  %882 = vmatpush1.msra.mxu0 0.0
  %883 = vmatprep.subr.mxu0 0.0
  %884 = vmatpush1.msra.mxu0 0.0
  %885 = vmatprep.subr.mxu0 0.0
  %886 = vmatpush1.msra.mxu0 0.0
  %887 = vmatprep.subr.mxu0 0.0
  %888 = vmatpush1.msra.mxu0 0.0
  %889 = vmatprep.subr.mxu0 0.0
  %890 = vmatpush1.msra.mxu0 0.0
  %891 = vmatprep.subr.mxu0 0.0
  %892 = vmatpush1.msra.mxu0 0.0
  %893 = vmatprep.subr.mxu0 0.0
  %894 = vmatpush1.msra.mxu0 0.0
  %895 = vmatprep.subr.mxu0 0.0
  %896 = vmatpush1.msra.mxu0 0.0
  %897 = vmatprep.subr.mxu0 0.0
  %898 = vmatpush1.msra.mxu0 0.0
  %899 = vmatprep.subr.mxu0 0.0
  %900 = vmatpush1.msra.mxu0 0.0
  %901 = vmatprep.subr.mxu0 0.0
  %902 = vmatpush1.msra.mxu0 0.0
  %903 = vmatprep.subr.mxu0 0.0
  %904 = vmatpush1.msra.mxu0 0.0
  %905 = vmatprep.subr.mxu0 0.0
  %906 = vmatpush1.msra.mxu0 0.0
  %907 = vmatprep.subr.mxu0 0.0
  %908 = vmatpush1.msra.mxu0 0.0
  %909 = vmatprep.mubr.f32.mxu0 0.0
  %910 = vmatmul.mubr.f32.gmra.mrb[0].mxu0 %v769
  %v911 = vpop.f32.mrb[0].mxu0
  %v912 = vadd.f32 0.0, %v911
  %v913 = vpop.f32.mrb[0].mxu0
  %914 = vdwg.mxu0
  %v915 = vadd.f32 %v771, %v841
  %v916 = vxor.u32 %v915, 2147483648
  %v917 = vmul.f32 %v916, 1.442695
  %v918 = vpow.pop %v917
  %v919 = vadd.f32 %v918, 1.0
  %v920 = vrcp.pop %v919
  %v921 = vmul.f32 1.0, %v920
  %v922 = vadd.f32 %v772, %v843
  %v923 = vxor.u32 %v922, 2147483648
  %v924 = vmul.f32 %v923, 1.442695
  %v925 = vpow.pop %v924
  %v926 = vadd.f32 %v925, 1.0
  %v927 = vrcp.pop %v926
  %v928 = vmul.f32 1.0, %v927
  %v929 = vadd.f32 %v912, %v30
  %v930 = vmul.f32 %v921, %v929
  %v931 = vadd.f32 %v773, %v930
  %v932 = vtanh.pop %v931
  %v933 = vsub.f32 1.0, %v928
  %v934 = vmul.f32 %v933, %v932
  %v935 = vmul.f32 %v928, %v769
  %v936 = vadd.f32 %v934, %v935
  %s937 = scalar_lea.vmem %s1, 32
  %v938 = vld [vmem:[%s937] sm:$0xff]
  %v939 = vmul.f32 %v938, %v936
  %v940 = vsub.f32 1.0, %v938
  %v941 = vmul.f32 %v940, %v769
  %v942 = vadd.f32 %v939, %v941
  %v943 = vld [vmem:[%s4] sm:$0xff]
  %v944 = vld [vmem:[%s4 + $0x8] sm:$0xff]
  %v945 = vld [vmem:[%s4 + $0x10] sm:$0xff]
  %v946 = vld [vmem:[%s4 + $0x18] sm:$0xff]
  %v947 = vld [vmem:[%s4 + $0x20] sm:$0xff]
  %v948 = vld [vmem:[%s4 + $0x28] sm:$0xff]
  %v949 = vld [vmem:[%s4 + $0x30] sm:$0xff]
  %v950 = vld [vmem:[%s4 + $0x38] sm:$0xff]
  %v951 = vld [vmem:[%s4 + $0x40] sm:$0xff]
  %v952 = vld [vmem:[%s4 + $0x48] sm:$0xff]
  %v953 = vld [vmem:[%s4 + $0x50] sm:$0xff]
  %v954 = vld [vmem:[%s4 + $0x58] sm:$0xff]
  %v955 = vld [vmem:[%s4 + $0x60] sm:$0xff]
  %v956 = vld [vmem:[%s4 + $0x68] sm:$0xff]
  %v957 = vld [vmem:[%s4 + $0x70] sm:$0xff]
  %v958 = vld [vmem:[%s4 + $0x78] sm:$0xff]
  %v959 = vld [vmem:[%s5] sm:$0x1]
  %v961 = vlaneseq
  %v962 = vshrl.u32 %v961, 7
  %v963 = vsub.s32 0, %v962
  %v964 = vrot.slane %v959, %v963
  %966 = vmatprep.subr.mxu0 0.0
  %967 = vmatpush1.msra.mxu0 %v943
  %968 = vmatprep.subr.mxu0 0.0
  %969 = vmatpush1.msra.mxu0 %v944
  %970 = vmatprep.subr.mxu0 0.0
  %971 = vmatpush1.msra.mxu0 %v945
  %972 = vmatprep.subr.mxu0 0.0
  %973 = vmatpush1.msra.mxu0 %v946
  %974 = vmatprep.subr.mxu0 0.0
  %975 = vmatpush1.msra.mxu0 %v947
  %976 = vmatprep.subr.mxu0 0.0
  %977 = vmatpush1.msra.mxu0 %v948
  %978 = vmatprep.subr.mxu0 0.0
  %979 = vmatpush1.msra.mxu0 %v949
  %980 = vmatprep.subr.mxu0 0.0
  %981 = vmatpush1.msra.mxu0 %v950
  %982 = vmatprep.subr.mxu0 0.0
  %983 = vmatpush1.msra.mxu0 %v951
  %984 = vmatprep.subr.mxu0 0.0
  %985 = vmatpush1.msra.mxu0 %v952
  %986 = vmatprep.subr.mxu0 0.0
  %987 = vmatpush1.msra.mxu0 %v953
  %988 = vmatprep.subr.mxu0 0.0
  %989 = vmatpush1.msra.mxu0 %v954
  %990 = vmatprep.subr.mxu0 0.0
  %991 = vmatpush1.msra.mxu0 %v955
  %992 = vmatprep.subr.mxu0 0.0
  %993 = vmatpush1.msra.mxu0 %v956
  %994 = vmatprep.subr.mxu0 0.0
  %995 = vmatpush1.msra.mxu0 %v957
  %996 = vmatprep.subr.mxu0 0.0
  %997 = vmatpush1.msra.mxu0 %v958
  %998 = vmatprep.subr.mxu0 0.0
  %999 = vmatpush1.msra.mxu0 0.0
  %1000 = vmatprep.subr.mxu0 0.0
  %1001 = vmatpush1.msra.mxu0 0.0
  %1002 = vmatprep.subr.mxu0 0.0
  %1003 = vmatpush1.msra.mxu0 0.0
  %1004 = vmatprep.subr.mxu0 0.0
  %1005 = vmatpush1.msra.mxu0 0.0
  %1006 = vmatprep.subr.mxu0 0.0
  %1007 = vmatpush1.msra.mxu0 0.0
  %1008 = vmatprep.subr.mxu0 0.0
  %1009 = vmatpush1.msra.mxu0 0.0
  %1010 = vmatprep.subr.mxu0 0.0
  %1011 = vmatpush1.msra.mxu0 0.0
  %1012 = vmatprep.subr.mxu0 0.0
  %1013 = vmatpush1.msra.mxu0 0.0
  %1014 = vmatprep.subr.mxu0 0.0
  %1015 = vmatpush1.msra.mxu0 0.0
  %1016 = vmatprep.subr.mxu0 0.0
  %1017 = vmatpush1.msra.mxu0 0.0
  %1018 = vmatprep.subr.mxu0 0.0
  %1019 = vmatpush1.msra.mxu0 0.0
  %1020 = vmatprep.subr.mxu0 0.0
  %1021 = vmatpush1.msra.mxu0 0.0
  %1022 = vmatprep.subr.mxu0 0.0
  %1023 = vmatpush1.msra.mxu0 0.0
  %1024 = vmatprep.subr.mxu0 0.0
  %1025 = vmatpush1.msra.mxu0 0.0
  %1026 = vmatprep.subr.mxu0 0.0
  %1027 = vmatpush1.msra.mxu0 0.0
  %1028 = vmatprep.subr.mxu0 0.0
  %1029 = vmatpush1.msra.mxu0 0.0
  %1030 = vmatprep.mubr.f32.mxu0 0.0
  %1031 = vmatmul.mubr.f32.gmra.mrb[0].mxu0 %v942
  %v1032 = vpop.f32.mrb[0].mxu0
  %v1033 = vadd.f32 %v964, %v1032
  %v1034 = vpop.f32.mrb[0].mxu0
  %1035 = vdwg.mxu0
  %1036 = vmax.xlane.f32.xlu0 %v1033
  %v1037 = vpop.xlane.xlu0 %1036
  %v1038 = vsub.f32 %v1033, %v1037
  %v1039 = vmul.f32 %v1038, 1.442695
  %v1040 = vpow.pop %v1039
  %1041 = vadd.xlane.f32.xlu0 %v1040
  %v1042 = vpop.xlane.xlu0 %1041
  %v1043 = vlog2.pop %v1042
  %v1044 = vmul.f32 %v1043, 0.6931472
  %v1045 = vadd.f32 %v1037, %v1044
  %v1046 = vsub.f32 %v1033, %v1045
  %1047 = vst [vmem:[%s6] sm:$0xff] %v1046
  %1048 = vst [vmem:[%s7] sm:$0xff] %v942
  // Predicated region
  $region26: #{forward.1} parent=0 // pred_check
    _
  $region27: #{forward.1} parent=0 // pred_check_branch
    %1050 = sbr.rel (0) target = $region29
  $region28: #{forward.1} parent=0 // pred_region
    _
  $region29: #{forward.1} parent=0 // pred_fallthru
    _
  // Predicated region
  $region30: #{forward.1} parent=0 // pred_check
    _
  $region31: #{forward.1} parent=0 // pred_check_branch
    %1052 = sbr.rel (0) target = $region33
  $region32: #{forward.1} parent=0 // pred_region
    _
  $region33: #{forward.1} parent=0 // pred_fallthru
    _
  // Predicated region
  $region34: #{forward.1} parent=0 // pred_check
    _
  $region35: #{forward.1} parent=0 // pred_check_branch
    %1054 = sbr.rel (0) target = $region37
  $region36: #{forward.1} parent=0 // pred_region
    _
  $region37: #{forward.1} parent=0 // pred_fallthru
    _
  // Predicated region
  $region38: #{forward.1} parent=0 // pred_check
    _
  $region39: #{forward.1} parent=0 // pred_check_branch
    %1056 = sbr.rel (0) target = $region41
  $region40: #{forward.1} parent=0 // pred_region
    _
  $region41: #{forward.1} parent=0 // pred_fallthru
    _

</llo_original>
